<compile_context>
chip_gen: v6e
topology: v6e:2x2x1
jax: 0.10.0
libtpu: 0.0.40
codegen_flags: <defaults>
</compile_context>

<pallas_src>
import math

import jax
import jax.numpy as jnp
from jax import lax
from jax.experimental import pallas as pl
from jax.experimental.pallas import tpu as pltpu

BN_EPS = 1e-5


# ----------------------------- Pallas kernels ------------------------------

def _mm_bias_relu_kernel(x_ref, w_ref, b_ref, o_ref):
    # o = relu(x @ w + bias)     (conv1 1x1 + BN folded into w/bias + ReLU)
    acc = jnp.dot(x_ref[...], w_ref[...], preferred_element_type=jnp.float32)
    o_ref[...] = jnp.maximum(acc + b_ref[...], 0.0).astype(o_ref.dtype)


def _deform_block_kernel(cols_ref, w2_ref, b2_ref, w3_ref, b3_ref, sc_ref, o_ref):
    # Fused conv2(deform im2col matmul)+bn2+relu and conv3(1x1)+bn3+residual+relu.
    # y2 never leaves VMEM -> saves the (M, width) bf16 HBM write+read and one launch.
    y2 = jnp.dot(cols_ref[...], w2_ref[...], preferred_element_type=jnp.float32)
    y2 = jnp.maximum(y2 + b2_ref[...], 0.0).astype(jnp.bfloat16)
    acc = jnp.dot(y2, w3_ref[...], preferred_element_type=jnp.float32)
    acc = acc + b3_ref[...] + sc_ref[...].astype(jnp.float32)
    o_ref[...] = jnp.maximum(acc, 0.0).astype(o_ref.dtype)


# -------------------------- tiling / VMEM helpers ---------------------------

def _vmem_limit_bytes():
    # Generation-aware scoped-VMEM request: ~3/4 of physical per-core VMEM
    # (64 MiB on v7x -> 48 MiB; 128 MiB on v5e/v6e -> 96 MiB).
    try:
        cap = int(pltpu.get_tpu_info().vmem_capacity_bytes)
    except Exception:
        cap = 64 * 1024 * 1024
    return (cap * 3) // 4


def _compiler_params(vmem_limit):
    return pltpu.CompilerParams(
        dimension_semantics=("parallel",),      # shards the M-grid across v7x's 2 TCs
        vmem_limit_bytes=int(vmem_limit))


def _resident_spec(shape):
    """BlockSpec for a grid-invariant (resident) operand; single-buffered when the
    installed Pallas supports pipeline_mode (constant index_map -> double-buffering
    would only waste VMEM)."""
    idx = lambda *args: (0,) * len(shape)
    try:
        return pl.BlockSpec(shape, idx, pipeline_mode=pl.Buffered(1))
    except Exception:
        return pl.BlockSpec(shape, idx)


def _pick_tm(M, budget_bytes, per_row_bytes, resident_bytes, tm_cap=2048):
    """Largest M-tile that (a) fits the VMEM budget, (b) leaves >=2 grid steps so both
    TensorCores get work on v7x and the pipeline has something to overlap, and (c)
    divides M exactly (no pad/slice HBM copies, no masked ragged tail)."""
    avail = max(budget_bytes - resident_bytes, 1 << 20)
    cap = max(8, min(tm_cap, avail // max(per_row_bytes, 1)))
    if M >= 16:
        cap = min(cap, M // 2)                  # guarantee grid_m >= 2
    cap = min(cap, M)
    if M <= 8:
        return M
    d = (cap // 8) * 8
    while d >= 8:                               # prefer a multiple-of-8 divisor of M
        if M % d == 0:
            return d
        d -= 8
    return max(8, (cap // 8) * 8)               # ragged tail; Pallas masks the partial block


# --------------------------- fused matmul wrappers ---------------------------

def conv1x1_bn_relu(x2d, w_bf16, bias_f32, *, out_dtype=jnp.bfloat16):
    """relu(x2d @ w + bias), tiled over rows. bf16 operands, f32 MXU accumulate."""
    M, K = x2d.shape
    C = w_bf16.shape[1]
    vmem_limit = _vmem_limit_bytes()
    budget = vmem_limit - (4 << 20)             # headroom for Mosaic internal scratch
    out_b = jnp.dtype(out_dtype).itemsize
    per_row = 2 * 2 * K + 2 * out_b * C + 4 * C           # dbl-buf in/out + f32 acc
    resident = 2 * K * C + 4 * C                           # single-buffered weights/bias
    TM = _pick_tm(M, budget, per_row, resident)
    grid_m = pl.cdiv(M, TM)

    return pl.pallas_call(
        _mm_bias_relu_kernel,
        out_shape=jax.ShapeDtypeStruct((M, C), out_dtype),
        grid=(grid_m,),
        in_specs=[pl.BlockSpec((TM, K), lambda i: (i, 0)),   # activations: tiled over M
                  _resident_spec((K, C)),                    # weights: resident, 1 buffer
                  _resident_spec((1, C))],                   # bias: resident, 1 buffer
        out_specs=pl.BlockSpec((TM, C), lambda i: (i, 0)),
        compiler_params=_compiler_params(vmem_limit),
    )(x2d, w_bf16, bias_f32.reshape(1, -1).astype(jnp.float32))


def deform_bottleneck_tail(cols, w2, b2, w3, b3, shortcut2d, *, out_dtype=jnp.float32):
    """Fused: relu( relu(cols @ w2 + b2) @ w3 + b3 + shortcut ), tiled over rows."""
    M, K = cols.shape
    width = w2.shape[1]
    Cout = w3.shape[1]
    vmem_limit = _vmem_limit_bytes()
    budget = vmem_limit - (4 << 20)
    out_b = jnp.dtype(out_dtype).itemsize
    per_row = (2 * 2 * K              # im2col columns, bf16, double-buffered
               + 2 * 2 * Cout         # shortcut, bf16, double-buffered
               + 2 * out_b * Cout     # output, double-buffered
               + 6 * width            # y2 f32 + bf16 intermediates
               + 4 * Cout)            # conv3 f32 accumulator
    resident = 2 * K * width + 2 * width * Cout + 4 * width + 4 * Cout
    TM = _pick_tm(M, budget, per_row, resident)
    grid_m = pl.cdiv(M, TM)

    return pl.pallas_call(
        _deform_block_kernel,
        out_shape=jax.ShapeDtypeStruct((M, Cout), out_dtype),
        grid=(grid_m,),
        in_specs=[pl.BlockSpec((TM, K), lambda i: (i, 0)),     # columns: tiled over M
                  _resident_spec((K, width)),                  # w2 (BN2 folded)
                  _resident_spec((1, width)),                  # b2
                  _resident_spec((width, Cout)),               # w3 (BN3 folded)
                  _resident_spec((1, Cout)),                   # b3
                  pl.BlockSpec((TM, Cout), lambda i: (i, 0))], # shortcut: tiled over M
        out_specs=pl.BlockSpec((TM, Cout), lambda i: (i, 0)),
        compiler_params=_compiler_params(vmem_limit),
    )(cols, w2, b2.reshape(1, -1).astype(jnp.float32),
      w3, b3.reshape(1, -1).astype(jnp.float32), shortcut2d)


# ------------------------------ JAX glue ------------------------------------

def bn_fold(gamma, beta, mean, var, eps=BN_EPS):
    scale = gamma / jnp.sqrt(var + eps)
    bias = beta - mean * scale
    return scale, bias


def deform_im2col(x, offset, ksize, stride, pad, dil, out_dtype=jnp.bfloat16):
    """Deformable im2col (bilinear sampling, zero outside bounds).

    x:      (N, H, W, C)  bf16
    offset: (N, Hout, Wout, 2*K) with (dy, dx) pairs per tap (torchvision/mmcv order)
    returns (N*Hout*Wout, K*C) in `out_dtype`, column order (k, c).

    Restructured per perf review: loop over the 4 bilinear corners, gather each in bf16,
    multiply-accumulate into a single (…, K, C) f32 accumulator — the (…, 4, K, C) f32
    corner stack is never materialized.
    """
    # TODO(synk): the data-dependent bilinear gather has no clean Pallas TPU equivalent
    # (dynamic gather); it stays in JAX glue. A future step is fusing it into the conv2
    # Pallas kernel via pl.ANY + scalar-prefetched manual DMA so the (M, 9C) column
    # buffer never hits HBM.
    N, H, W, C = x.shape
    Hout, Wout = offset.shape[1], offset.shape[2]
    K = ksize * ksize
    off = offset.reshape(N, Hout, Wout, K, 2).astype(jnp.float32)
    dy = off[..., 0]
    dx = off[..., 1]

    ky, kx = jnp.meshgrid(jnp.arange(ksize), jnp.arange(ksize), indexing="ij")
    ky = ky.reshape(-1).astype(jnp.float32)
    kx = kx.reshape(-1).astype(jnp.float32)
    yo = jnp.arange(Hout, dtype=jnp.float32)
    xo = jnp.arange(Wout, dtype=jnp.float32)

    py = yo[None, :, None, None] * stride - pad + dil * ky[None, None, None, :] + dy
    px = xo[None, None, :, None] * stride - pad + dil * kx[None, None, None, :] + dx

    y0 = jnp.floor(py)
    x0 = jnp.floor(px)
    ly = py - y0
    lx = px - x0
    hy = 1.0 - ly
    hx = 1.0 - lx
    y0i = y0.astype(jnp.int32)
    x0i = x0.astype(jnp.int32)

    x_flat = x.astype(jnp.bfloat16).reshape(N, H * W, C)

    def gather_corner(yc, xc):
        valid = (yc >= 0) & (yc < H) & (xc >= 0) & (xc < W)
        idx = jnp.clip(yc, 0, H - 1) * W + jnp.clip(xc, 0, W - 1)   # (N,Hout,Wout,K)

        def one(xn, idxn):
            return jnp.take(xn, idxn.reshape(-1), axis=0).reshape(Hout, Wout, K, C)

        vals = jax.vmap(one)(x_flat, idx)                            # (N,Hout,Wout,K,C) bf16
        return vals, valid

    corners = (
        (y0i,     x0i,     hy * hx),
        (y0i,     x0i + 1, hy * lx),
        (y0i + 1, x0i,     ly * hx),
        (y0i + 1, x0i + 1, ly * lx),
    )
    acc = jnp.zeros((N, Hout, Wout, K, C), jnp.float32)
    for yc, xc, wcorn in corners:
        vals, valid = gather_corner(yc, xc)
        wgt = (wcorn * valid.astype(jnp.float32))[..., None]         # zero-pad outside bounds
        acc = acc + vals.astype(jnp.float32) * wgt

    return acc.reshape(N * Hout * Wout, K * C).astype(out_dtype)


# ------------------------ DeformableBottleneck forward ----------------------

def deformable_bottleneck_forward(x_nchw, params, stride=1, dilation=1):
    # downsample=None => identity shortcut; only valid for stride=1 and Cin==outplanes
    # (same constraint the PyTorch module has when downsample is None).
    assert stride == 1, "identity shortcut requires stride == 1 (downsample not implemented)"

    # Cast to bf16 BEFORE the layout transpose: the NCHW->NHWC transpose is pure HBM
    # bandwidth, so moving bf16 halves its cost.
    x = jnp.transpose(x_nchw.astype(jnp.bfloat16), (0, 2, 3, 1))     # NCHW -> NHWC, bf16
    N, H, W, Cin = x.shape

    # conv1 (1x1) + bn1 + relu  (BN scale folded into the weight at trace time)
    s1, b1 = bn_fold(*params["bn1"])
    w1 = (params["conv1_w"] * s1[None, :]).astype(jnp.bfloat16)
    first_planes = w1.shape[1]
    y1 = conv1x1_bn_relu(x.reshape(N * H * W, Cin), w1, b1, out_dtype=jnp.bfloat16)
    y1 = y1.reshape(N, H, W, first_planes)

    # conv2_offset (regular 3x3 conv with bias, only 18 output channels) -> plain XLA conv,
    # bf16 input/weight with f32 accumulation (this stage is input-bandwidth bound).
    offset = lax.conv_general_dilated(
        y1, params["conv2_offset_w"].astype(jnp.bfloat16),
        window_strides=(stride, stride),
        padding=[(dilation, dilation), (dilation, dilation)],
        rhs_dilation=(dilation, dilation),
        dimension_numbers=("NHWC", "HWIO", "NHWC"),
        preferred_element_type=jnp.float32,
    ) + params["conv2_offset_b"][None, None, None, :]
    Hout, Wout = offset.shape[1], offset.shape[2]

    # deformable im2col (bf16 columns)
    cols = deform_im2col(y1, offset, 3, stride, dilation, dilation, out_dtype=jnp.bfloat16)

    # conv2 (deformable 3x3) + bn2 + relu fused with conv3 (1x1) + bn3 + shortcut + relu
    s2, b2 = bn_fold(*params["bn2"])
    w2 = (params["conv2_w"] * s2[None, :]).astype(jnp.bfloat16)
    s3, b3 = bn_fold(*params["bn3"])
    w3 = (params["conv3_w"] * s3[None, :]).astype(jnp.bfloat16)
    outplanes = w3.shape[1]

    assert outplanes == Cin and Hout == H and Wout == W, (
        "identity shortcut requires Cin == planes*4 and unchanged spatial dims")

    shortcut = x.reshape(N * H * W, Cin)                              # bf16
    y3 = deform_bottleneck_tail(cols, w2, b2, w3, b3, shortcut, out_dtype=jnp.float32)

    out = y3.reshape(N, Hout, Wout, outplanes)
    return jnp.transpose(out, (0, 3, 1, 2))                           # NHWC -> NCHW


# ------------------------------ parameter init -------------------------------

def init_params(key, inplanes, planes, base_width=64, cardinality=1, reduce_first=1):
    width = int(math.floor(planes * (base_width / 64)) * cardinality)
    first_planes = width // reduce_first
    outplanes = planes * 4  # expansion = 4
    ks = jax.random.split(key, 6)

    conv1_w = 0.1 * jax.random.normal(ks[0], (inplanes, first_planes), jnp.float32)

    # conv2 weight: (Cout, Cin, 3, 3) -> (KH, KW, Cin, Cout) -> (9*Cin, Cout) (matches im2col)
    w2 = 0.1 * jax.random.normal(ks[1], (width, first_planes, 3, 3), jnp.float32)
    conv2_w = jnp.transpose(w2, (2, 3, 1, 0)).reshape(9 * first_planes, width)

    conv3_w = 0.1 * jax.random.normal(ks[2], (width, outplanes), jnp.float32)

    # conv2_offset: zero-initialized per the module's __init__ (nn.init.constant_(..., 0)).
    # Stored HWIO for lax.conv_general_dilated.
    conv2_offset_w = jnp.zeros((3, 3, first_planes, 18), jnp.float32)
    conv2_offset_b = jnp.zeros((18,), jnp.float32)

    def bn(k, c):
        k1, k2 = jax.random.split(k)
        gamma = 1.0 + 0.1 * jax.random.normal(k1, (c,), jnp.float32)
        beta = 0.1 * jax.random.normal(k2, (c,), jnp.float32)
        mean = jnp.zeros((c,), jnp.float32)
        var = jnp.ones((c,), jnp.float32)
        return (gamma, beta, mean, var)

    return dict(
        conv1_w=conv1_w, bn1=bn(ks[3], first_planes),
        conv2_offset_w=conv2_offset_w, conv2_offset_b=conv2_offset_b,
        conv2_w=conv2_w, bn2=bn(ks[4], width),
        conv3_w=conv3_w, bn3=bn(ks[5], outplanes),
    )


# ----------------------------------- main ------------------------------------

if __name__ == "__main__":
    key = jax.random.PRNGKey(0)
    k_x, k_p = jax.random.split(key)

    inplanes, planes = 16, 4          # outplanes = planes*4 = 16 == inplanes (identity shortcut)
    x = jax.random.normal(k_x, (2, inplanes, 16, 16), jnp.float32)  # NCHW, like PyTorch
    params = init_params(k_p, inplanes, planes)

    fwd = jax.jit(lambda inp: deformable_bottleneck_forward(inp, params, stride=1, dilation=1))
    out = jax.block_until_ready(fwd(x))

    assert out.shape == (2, 16, 16, 16), out.shape
    assert bool(jnp.all(jnp.isfinite(out)))
    print("KERNEL_OK")
</pallas_src>

<mosaic_0001>
module attributes {stable_mosaic.version = 11 : i64} {
  func.func @_mm_bias_relu_kernel(%arg0: i32, %arg1: memref<256x16xbf16, #tpu.memory_space<vmem>>, %arg2: memref<16x4xbf16, #tpu.memory_space<vmem>>, %arg3: memref<1x4xf32, #tpu.memory_space<vmem>>, %arg4: memref<256x4xbf16, #tpu.memory_space<vmem>>) attributes {dimension_semantics = [#tpu.dimension_semantics<parallel>], iteration_bounds = array<i64: 2>, scalar_prefetch = 0 : i64, scratch_operands = 0 : i64, tpu.core_type = #tpu.core_type<tc>, window_params = [{transform_indices = @transform_0, window_bounds = array<i64: 256, 16>}, {pipeline_mode = #tpu.pipeline_mode<synchronous>, transform_indices = @transform_1, window_bounds = array<i64: 16, 4>}, {pipeline_mode = #tpu.pipeline_mode<synchronous>, transform_indices = @transform_2, window_bounds = array<i64: 1, 4>}, {transform_indices = @transform_3, window_bounds = array<i64: 256, 4>}]} {
    %c0 = arith.constant 0 : index
    %c0_0 = arith.constant 0 : index
    %0 = vector.load %arg1[%c0, %c0_0] : memref<256x16xbf16, #tpu.memory_space<vmem>>, vector<256x16xbf16>
    %c0_1 = arith.constant 0 : index
    %c0_2 = arith.constant 0 : index
    %1 = vector.load %arg2[%c0_1, %c0_2] : memref<16x4xbf16, #tpu.memory_space<vmem>>, vector<16x4xbf16>
    %cst = arith.constant dense<0.000000e+00> : vector<256x4xf32>
    %2 = tpu.matmul %0, %1, %cst {dimension_numbers = #tpu.dot_dimension_numbers<[1], [0], [0], [1], [0, 0, 1, 1], [], []>} : vector<256x16xbf16>, vector<16x4xbf16>, vector<256x4xf32> -> vector<256x4xf32>
    %c0_3 = arith.constant 0 : index
    %c0_4 = arith.constant 0 : index
    %3 = vector.load %arg3[%c0_3, %c0_4] : memref<1x4xf32, #tpu.memory_space<vmem>>, vector<1x4xf32>
    %4 = vector.broadcast %3 : vector<1x4xf32> to vector<256x4xf32>
    %5 = arith.addf %2, %4 : vector<256x4xf32>
    %cst_5 = arith.constant 0.000000e+00 : f32
    %6 = vector.broadcast %cst_5 : f32 to vector<256x4xf32>
    %7 = arith.maximumf %5, %6 : vector<256x4xf32>
    %8 = arith.truncf %7 : vector<256x4xf32> to vector<256x4xbf16>
    %c0_6 = arith.constant 0 : index
    %c0_7 = arith.constant 0 : index
    %9 = vector.load %arg4[%c0_6, %c0_7] : memref<256x4xbf16, #tpu.memory_space<vmem>>, vector<256x4xbf16>
    tpu.vector_store %arg4[%c0_6, %c0_7], %8 {strides = array<i32>} : memref<256x4xbf16, #tpu.memory_space<vmem>>, vector<256x4xbf16>,
    return
  }
  func.func @transform_0(%arg0: i32) -> (i32, i32) {
    %c0_i32 = arith.constant 0 : i32
    %c0_i32_0 = arith.constant 0 : i32
    return %arg0, %c0_i32 : i32, i32
  }
  func.func @transform_1(%arg0: i32) -> (i32, i32) {
    %c0_i32 = arith.constant 0 : i32
    %c0_i32_0 = arith.constant 0 : i32
    %c0_i32_1 = arith.constant 0 : i32
    return %c0_i32, %c0_i32_0 : i32, i32
  }
  func.func @transform_2(%arg0: i32) -> (i32, i32) {
    %c0_i32 = arith.constant 0 : i32
    %c0_i32_0 = arith.constant 0 : i32
    %c0_i32_1 = arith.constant 0 : i32
    return %c0_i32, %c0_i32_0 : i32, i32
  }
  func.func @transform_3(%arg0: i32) -> (i32, i32) {
    %c0_i32 = arith.constant 0 : i32
    %c0_i32_0 = arith.constant 0 : i32
    return %arg0, %c0_i32 : i32, i32
  }
}

module attributes {stable_mosaic.version = 11 : i64} {
  func.func @_deform_block_kernel(%arg0: i32, %arg1: memref<256x36xbf16, #tpu.memory_space<vmem>>, %arg2: memref<36x4xbf16, #tpu.memory_space<vmem>>, %arg3: memref<1x4xf32, #tpu.memory_space<vmem>>, %arg4: memref<4x16xbf16, #tpu.memory_space<vmem>>, %arg5: memref<1x16xf32, #tpu.memory_space<vmem>>, %arg6: memref<256x16xbf16, #tpu.memory_space<vmem>>, %arg7: memref<256x16xf32, #tpu.memory_space<vmem>>) attributes {dimension_semantics = [#tpu.dimension_semantics<parallel>], iteration_bounds = array<i64: 2>, scalar_prefetch = 0 : i64, scratch_operands = 0 : i64, tpu.core_type = #tpu.core_type<tc>, window_params = [{transform_indices = @transform_0, window_bounds = array<i64: 256, 36>}, {pipeline_mode = #tpu.pipeline_mode<synchronous>, transform_indices = @transform_1, window_bounds = array<i64: 36, 4>}, {pipeline_mode = #tpu.pipeline_mode<synchronous>, transform_indices = @transform_2, window_bounds = array<i64: 1, 4>}, {pipeline_mode = #tpu.pipeline_mode<synchronous>, transform_indices = @transform_3, window_bounds = array<i64: 4, 16>}, {pipeline_mode = #tpu.pipeline_mode<synchronous>, transform_indices = @transform_4, window_bounds = array<i64: 1, 16>}, {transform_indices = @transform_5, window_bounds = array<i64: 256, 16>}, {transform_indices = @transform_6, window_bounds = array<i64: 256, 16>}]} {
    %c0 = arith.constant 0 : index
    %c0_0 = arith.constant 0 : index
    %0 = vector.load %arg1[%c0, %c0_0] : memref<256x36xbf16, #tpu.memory_space<vmem>>, vector<256x36xbf16>
    %c0_1 = arith.constant 0 : index
    %c0_2 = arith.constant 0 : index
    %1 = vector.load %arg2[%c0_1, %c0_2] : memref<36x4xbf16, #tpu.memory_space<vmem>>, vector<36x4xbf16>
    %cst = arith.constant dense<0.000000e+00> : vector<256x4xf32>
    %2 = tpu.matmul %0, %1, %cst {dimension_numbers = #tpu.dot_dimension_numbers<[1], [0], [0], [1], [0, 0, 1, 1], [], []>} : vector<256x36xbf16>, vector<36x4xbf16>, vector<256x4xf32> -> vector<256x4xf32>
    %c0_3 = arith.constant 0 : index
    %c0_4 = arith.constant 0 : index
    %3 = vector.load %arg3[%c0_3, %c0_4] : memref<1x4xf32, #tpu.memory_space<vmem>>, vector<1x4xf32>
    %4 = vector.broadcast %3 : vector<1x4xf32> to vector<256x4xf32>
    %5 = arith.addf %2, %4 : vector<256x4xf32>
    %cst_5 = arith.constant 0.000000e+00 : f32
    %6 = vector.broadcast %cst_5 : f32 to vector<256x4xf32>
    %7 = arith.maximumf %5, %6 : vector<256x4xf32>
    %8 = arith.truncf %7 : vector<256x4xf32> to vector<256x4xbf16>
    %c0_6 = arith.constant 0 : index
    %c0_7 = arith.constant 0 : index
    %9 = vector.load %arg4[%c0_6, %c0_7] : memref<4x16xbf16, #tpu.memory_space<vmem>>, vector<4x16xbf16>
    %cst_8 = arith.constant dense<0.000000e+00> : vector<256x16xf32>
    %10 = tpu.matmul %8, %9, %cst_8 {dimension_numbers = #tpu.dot_dimension_numbers<[1], [0], [0], [1], [0, 0, 1, 1], [], []>} : vector<256x4xbf16>, vector<4x16xbf16>, vector<256x16xf32> -> vector<256x16xf32>
    %c0_9 = arith.constant 0 : index
    %c0_10 = arith.constant 0 : index
    %11 = vector.load %arg5[%c0_9, %c0_10] : memref<1x16xf32, #tpu.memory_space<vmem>>, vector<1x16xf32>
    %12 = vector.broadcast %11 : vector<1x16xf32> to vector<256x16xf32>
    %13 = arith.addf %10, %12 : vector<256x16xf32>
    %c0_11 = arith.constant 0 : index
    %c0_12 = arith.constant 0 : index
    %14 = vector.load %arg6[%c0_11, %c0_12] : memref<256x16xbf16, #tpu.memory_space<vmem>>, vector<256x16xbf16>
    %15 = arith.extf %14 : vector<256x16xbf16> to vector<256x16xf32>
    %16 = arith.addf %13, %15 : vector<256x16xf32>
    %cst_13 = arith.constant 0.000000e+00 : f32
    %17 = vector.broadcast %cst_13 : f32 to vector<256x16xf32>
    %18 = arith.maximumf %16, %17 : vector<256x16xf32>
    %c0_14 = arith.constant 0 : index
    %c0_15 = arith.constant 0 : index
    %19 = vector.load %arg7[%c0_14, %c0_15] : memref<256x16xf32, #tpu.memory_space<vmem>>, vector<256x16xf32>
    tpu.vector_store %arg7[%c0_14, %c0_15], %18 {strides = array<i32>} : memref<256x16xf32, #tpu.memory_space<vmem>>, vector<256x16xf32>,
    return
  }
  func.func @transform_0(%arg0: i32) -> (i32, i32) {
    %c0_i32 = arith.constant 0 : i32
    %c0_i32_0 = arith.constant 0 : i32
    return %arg0, %c0_i32 : i32, i32
  }
  func.func @transform_1(%arg0: i32) -> (i32, i32) {
    %c0_i32 = arith.constant 0 : i32
    %c0_i32_0 = arith.constant 0 : i32
    %c0_i32_1 = arith.constant 0 : i32
    return %c0_i32, %c0_i32_0 : i32, i32
  }
  func.func @transform_2(%arg0: i32) -> (i32, i32) {
    %c0_i32 = arith.constant 0 : i32
    %c0_i32_0 = arith.constant 0 : i32
    %c0_i32_1 = arith.constant 0 : i32
    return %c0_i32, %c0_i32_0 : i32, i32
  }
  func.func @transform_3(%arg0: i32) -> (i32, i32) {
    %c0_i32 = arith.constant 0 : i32
    %c0_i32_0 = arith.constant 0 : i32
    %c0_i32_1 = arith.constant 0 : i32
    return %c0_i32, %c0_i32_0 : i32, i32
  }
  func.func @transform_4(%arg0: i32) -> (i32, i32) {
    %c0_i32 = arith.constant 0 : i32
    %c0_i32_0 = arith.constant 0 : i32
    %c0_i32_1 = arith.constant 0 : i32
    return %c0_i32, %c0_i32_0 : i32, i32
  }
  func.func @transform_5(%arg0: i32) -> (i32, i32) {
    %c0_i32 = arith.constant 0 : i32
    %c0_i32_0 = arith.constant 0 : i32
    return %arg0, %c0_i32 : i32, i32
  }
  func.func @transform_6(%arg0: i32) -> (i32, i32) {
    %c0_i32 = arith.constant 0 : i32
    %c0_i32_0 = arith.constant 0 : i32
    return %arg0, %c0_i32 : i32, i32
  }
}

</mosaic_0001>

<llo_original>
// kernel: _lambda_.2
$region0: #{_lambda_.2}
  #allocation0 [shape = 'u32[]', space=smem, size = 0x4, offset = 0x4, fixed_abs, tag = 'smem constant byte address 0x4 - core index']
  #allocation1 [shape = 'u32[144,128]{1,0:T(1,128)}', space=vmem, size = 0x12000, scoped, tag = 'internal scratch']
  %s0 = inlined_call_operand.vmem [shape: bf16[512,16], index: 0, kind: input, shape index: {}]
  %s1 = inlined_call_operand.hbm [shape: bf16[16,4], index: 1, kind: input, shape index: {}]
  %s2 = inlined_call_operand.hbm [shape: f32[1,4], index: 2, kind: input, shape index: {}]
  %s3 = inlined_call_operand.vmem [shape: bf16[512,4], index: 3, kind: output, shape index: {}]
  %s4 = sld [smem:[#allocation0]]
  $region53: #{_lambda_.2} parent=0
    _
  %s6 = ssub.s32 1, %s4
  %s7 = scalar_select 0, %s6, %s4
  $region1: #{_lambda_.2} parent=0
    #allocation2 [shape = 'u8[4096]{0}', space=vmem, size = 0x1000, scoped, tag = 'input window, operand 1, single buffered']
    #allocation3 [shape = 's32[2]{0}', space=sflag, size = 0x8, scoped, tag = 'scoped memory for _lambda_.2']
    #allocation4 [shape = 'u8[512]{0}', space=vmem, size = 0x400, scoped, tag = 'input window, operand 2, single buffered']
    #allocation5 [shape = 's32[1]{0}', space=sflag, size = 0x4, scoped, tag = 'scoped memory for _lambda_.2']
    %8 = vsyncpa [#allocation3], 0
    %9 = vsyncpa [#allocation5], 0
    loop: start=0, step=1, limit=4
    $region2: #{_lambda_.2} parent=1 // loop_pre_header
      _
    $region3: #{_lambda_.2} parent=1 // loop_header
      %s11 = sphi 0, %s15
      %p12 = scmp.ge.s32.totalorder %s11, 4
      %s21 = sphi 0, %s23
      %s24 = sphi 0, %s21
      %s25 = sphi 0, %s24
      %s41 = sphi 0, %s25
      %s45 = sphi 0, %s45
      %s47 = sphi 0, %s45
      %s48 = sphi 0, %s47
      %s62 = sphi 0, %s48
      %s66 = sphi 0, %s66
      %s68 = sphi 0, %s66
      %s69 = sphi 0, %s68
      %s83 = sphi 0, %s69
      %s89 = sphi 0, %s91
      %s92 = sphi 0, %s89
      %s93 = sphi 0, %s92
      %s109 = sphi 0, %s93
    $region4: #{_lambda_.2} parent=1 // loop_header_branch
      %14 = sbr.rel (%p12) target = $region8
    $region5: #{_lambda_.2} parent=1 // loop_body
      %s16 = ssub.s32 %s11, 1
      %s17 = ssub.s32 %s11, 2
      %s18 = sadd.s32 %s11, 1
      %s19 = ssub.s32 %s11, %s18
      %p20 = scmp.eq.s32.totalorder %s19, 0
      %s22 = sadd.s32 %s21, 1
      %s23 = scalar_select %p20, %s21, %s22
      %p26 = pneg %p20
      %p27 = scmp.eq.s32.totalorder %s11, 1
      %p28 = por %p26, %p27
      %p29 = scmp.ne.s32.totalorder %s21, %s24
      %p30 = scmp.eq.s32.totalorder %s11, 0
      %p31 = por %p29, %p30
      %p32 = scmp.ne.s32.totalorder %s21, %s24
      %p33 = scmp.eq.s32.totalorder %s16, 1
      %p34 = por %p32, %p33
      %p35 = scmp.ne.s32.totalorder %s24, %s25
      %p36 = scmp.eq.s32.totalorder %s16, 0
      %p37 = por %p35, %p36
      %p38 = scmp.ne.s32.totalorder %s24, %s25
      %p39 = scmp.eq.s32.totalorder %s17, 1
      %p40 = por %p38, %p39
      %p42 = scmp.ne.s32.totalorder %s25, %s41
      %p43 = scmp.eq.s32.totalorder %s17, 0
      %p44 = por %p42, %p43
      %s46 = sadd.s32 %s45, 1
      %p49 = scmp.eq.s32.totalorder %s11, 1
      %p50 = scmp.ne.s32.totalorder %s45, %s47
      %p51 = scmp.eq.s32.totalorder %s11, 0
      %p52 = por %p50, %p51
      %p53 = scmp.ne.s32.totalorder %s45, %s47
      %p54 = scmp.eq.s32.totalorder %s16, 1
      %p55 = por %p53, %p54
      %p56 = scmp.ne.s32.totalorder %s47, %s48
      %p57 = scmp.eq.s32.totalorder %s16, 0
      %p58 = por %p56, %p57
      %p59 = scmp.ne.s32.totalorder %s47, %s48
      %p60 = scmp.eq.s32.totalorder %s17, 1
      %p61 = por %p59, %p60
      %p63 = scmp.ne.s32.totalorder %s48, %s62
      %p64 = scmp.eq.s32.totalorder %s17, 0
      %p65 = por %p63, %p64
      %s67 = sadd.s32 %s66, 1
      %p70 = scmp.eq.s32.totalorder %s11, 1
      %p71 = scmp.ne.s32.totalorder %s66, %s68
      %p72 = scmp.eq.s32.totalorder %s11, 0
      %p73 = por %p71, %p72
      %p74 = scmp.ne.s32.totalorder %s66, %s68
      %p75 = scmp.eq.s32.totalorder %s16, 1
      %p76 = por %p74, %p75
      %p77 = scmp.ne.s32.totalorder %s68, %s69
      %p78 = scmp.eq.s32.totalorder %s16, 0
      %p79 = por %p77, %p78
      %p80 = scmp.ne.s32.totalorder %s68, %s69
      %p81 = scmp.eq.s32.totalorder %s17, 1
      %p82 = por %p80, %p81
      %p84 = scmp.ne.s32.totalorder %s69, %s83
      %p85 = scmp.eq.s32.totalorder %s17, 0
      %p86 = por %p84, %p85
      %s87 = ssub.s32 %s11, %s18
      %p88 = scmp.eq.s32.totalorder %s87, 0
      %s90 = sadd.s32 %s89, 1
      %s91 = scalar_select %p88, %s89, %s90
      %p94 = pneg %p88
      %p95 = scmp.eq.s32.totalorder %s11, 1
      %p96 = por %p94, %p95
      %p97 = scmp.ne.s32.totalorder %s89, %s92
      %p98 = scmp.eq.s32.totalorder %s11, 0
      %p99 = por %p97, %p98
      %p100 = scmp.ne.s32.totalorder %s89, %s92
      %p101 = scmp.eq.s32.totalorder %s16, 1
      %p102 = por %p100, %p101
      %p103 = scmp.ne.s32.totalorder %s92, %s93
      %p104 = scmp.eq.s32.totalorder %s16, 0
      %p105 = por %p103, %p104
      %p106 = scmp.ne.s32.totalorder %s92, %s93
      %p107 = scmp.eq.s32.totalorder %s17, 1
      %p108 = por %p106, %p107
      %p110 = scmp.ne.s32.totalorder %s93, %s109
      %p111 = scmp.eq.s32.totalorder %s17, 0
      %p112 = por %p110, %p111
      %p113 = scmp.le.s32.totalorder 1, %s11
      %p114 = scmp.lt.s32.totalorder %s11, 3
      %p115 = pnand %p113, %p114
      %p116 = pneg %p115
      // Predicated region
      $region9: #{_lambda_.2} parent=5 // pred_check
        _
      $region10: #{_lambda_.2} parent=5 // pred_check_branch
        %118 = sbr.rel (%p115) target = $region12
      $region11: #{_lambda_.2} parent=5 // pred_region
        %s119 = ssub.s32 %s11, 1
        // Predicated region
        $region13: #{_lambda_.2} parent=11 // pred_check
          %p120 = pneg %p58
        $region14: #{_lambda_.2} parent=11 // pred_check_branch
          %122 = sbr.rel (%p120) target = $region16
        $region15: #{_lambda_.2} parent=11 // pred_region
          %s124 = ssub.s32 128, 128
          %125 = vsyncadd [#allocation3], %s124
          %s126 = sshll.u32 [#allocation2], 4
          %s127 = int_to_ptr.vmem [resolvable:$true] %s126
          %132 = dma.hbm_to_vmem [thread:$0]  %s1, 128, %s127, [#allocation3], 64, 64, 4
        $region16: #{_lambda_.2} parent=11 // pred_fallthru
          _
        // Predicated region
        $region17: #{_lambda_.2} parent=11 // pred_check
          %p133 = pneg %p79
        $region18: #{_lambda_.2} parent=11 // pred_check_branch
          %135 = sbr.rel (%p133) target = $region20
        $region19: #{_lambda_.2} parent=11 // pred_region
          %s137 = ssub.s32 16, 16
          %138 = vsyncadd [#allocation5], %s137
          %s140 = sshll.u32 [#allocation4], 4
          %s141 = int_to_ptr.vmem [resolvable:$true] %s140
          %143 = dma.hbm_to_vmem [thread:$0]  %s2, 16, %s141, [#allocation5]
        $region20: #{_lambda_.2} parent=11 // pred_fallthru
          _
      $region12: #{_lambda_.2} parent=5 // pred_fallthru
        _
      %p144 = scmp.lt.s32.totalorder %s11, 2
      // Predicated region
      $region21: #{_lambda_.2} parent=5 // pred_check
        %p145 = pneg %p144
      $region22: #{_lambda_.2} parent=5 // pred_check_branch
        %147 = sbr.rel (%p145) target = $region24
      $region23: #{_lambda_.2} parent=5 // pred_region
        // Predicated region
        $region25: #{_lambda_.2} parent=23 // pred_check
          %p148 = pneg %p31
        $region26: #{_lambda_.2} parent=23 // pred_check_branch
          %150 = sbr.rel (%p148) target = $region28
        $region27: #{_lambda_.2} parent=23 // pred_region
          %s151 = smul.u32 32, %s11
          %p152 = scmp.lt.s32.totalorder %s151, 63
          %s153 = scalar_select %p152, %s151, 63
          %s154 = smul.addr %s153, 4
          %s155 = scalar_lea.vmem %s0, %s154
          %s156 = smul.u32 32, %s11
        $region28: #{_lambda_.2} parent=23 // pred_fallthru
          _
      $region24: #{_lambda_.2} parent=5 // pred_fallthru
        _
      %p157 = scmp.le.s32.totalorder 1, %s11
      %p158 = scmp.lt.s32.totalorder %s11, 3
      %p159 = pnand %p157, %p158
      %p160 = pneg %p159
      // Predicated region
      $region29: #{_lambda_.2} parent=5 // pred_check
        _
      $region30: #{_lambda_.2} parent=5 // pred_check_branch
        %162 = sbr.rel (%p159) target = $region32
      $region31: #{_lambda_.2} parent=5 // pred_region
        %s163 = ssub.s32 %s11, 1
        // Predicated region
        $region33: #{_lambda_.2} parent=31 // pred_check
          %p164 = pneg %p58
        $region34: #{_lambda_.2} parent=31 // pred_check_branch
          %166 = sbr.rel (%p164) target = $region36
        $region35: #{_lambda_.2} parent=31 // pred_region
          %167 = dma.done [#allocation3], 128
        $region36: #{_lambda_.2} parent=31 // pred_fallthru
          _
        // Predicated region
        $region37: #{_lambda_.2} parent=31 // pred_check
          %p168 = pneg %p79
        $region38: #{_lambda_.2} parent=31 // pred_check_branch
          %170 = sbr.rel (%p168) target = $region40
        $region39: #{_lambda_.2} parent=31 // pred_region
          %171 = dma.done [#allocation5], 16
        $region40: #{_lambda_.2} parent=31 // pred_fallthru
          _
        %s172 = smul.u32 32, %s16
        %p173 = scmp.lt.s32.totalorder %s172, 63
        %s174 = scalar_select %p173, %s172, 63
        %s175 = smul.addr %s174, 4
        %s176 = scalar_lea.vmem %s0, %s175
        %p177 = pneg %p37
        %p178 = pneg %p34
        %p179 = pneg %p58
        %p180 = pneg %p55
        %p181 = pneg %p79
        %p182 = pneg %p76
        %p183 = pneg %p105
        %p184 = pneg %p102
        %s185 = smul.u32 32, %s16
        %p186 = scmp.lt.s32.totalorder %s185, 63
        %s187 = scalar_select %p186, %s185, 63
        %s188 = smul.addr %s187, 4
        %s189 = scalar_lea.vmem %s3, %s188
        %s190 = smul.u32 32, %s16
        %p191 = scmp.lt.s32.totalorder %s190, 63
        %s192 = scalar_select %p191, %s190, 63
        %s193 = smul.addr %s192, 4
        %s194 = scalar_lea.vmem %s0, %s193
        %s195 = smul.u32 32, %s16
        %s196 = smul.u32 32, %s16
        %p197 = scmp.lt.s32.totalorder %s196, 63
        %s198 = scalar_select %p197, %s196, 63
        %s199 = smul.addr %s198, 4
        %s200 = scalar_lea.vmem %s3, %s199
        %s201 = smul.u32 32, %s16
        %v203 = vld [vmem:[%s194] sm:$0xf]
        %v204 = vld [vmem:[%s194 + $0x4] sm:$0xf]
        %v205 = vld [vmem:[%s194 + $0x8] sm:$0xf]
        %v206 = vld [vmem:[%s194 + $0xc] sm:$0xf]
        %v207 = vld [vmem:[%s194 + $0x10] sm:$0xf]
        %v208 = vld [vmem:[%s194 + $0x14] sm:$0xf]
        %v209 = vld [vmem:[%s194 + $0x18] sm:$0xf]
        %v210 = vld [vmem:[%s194 + $0x1c] sm:$0xf]
        %v211 = vld [vmem:[%s194 + $0x20] sm:$0xf]
        %v212 = vld [vmem:[%s194 + $0x24] sm:$0xf]
        %v213 = vld [vmem:[%s194 + $0x28] sm:$0xf]
        %v214 = vld [vmem:[%s194 + $0x2c] sm:$0xf]
        %v215 = vld [vmem:[%s194 + $0x30] sm:$0xf]
        %v216 = vld [vmem:[%s194 + $0x34] sm:$0xf]
        %v217 = vld [vmem:[%s194 + $0x38] sm:$0xf]
        %v218 = vld [vmem:[%s194 + $0x3c] sm:$0xf]
        %v219 = vld [vmem:[%s194 + $0x40] sm:$0xf]
        %v220 = vld [vmem:[%s194 + $0x44] sm:$0xf]
        %v221 = vld [vmem:[%s194 + $0x48] sm:$0xf]
        %v222 = vld [vmem:[%s194 + $0x4c] sm:$0xf]
        %v223 = vld [vmem:[%s194 + $0x50] sm:$0xf]
        %v224 = vld [vmem:[%s194 + $0x54] sm:$0xf]
        %v225 = vld [vmem:[%s194 + $0x58] sm:$0xf]
        %v226 = vld [vmem:[%s194 + $0x5c] sm:$0xf]
        %v227 = vld [vmem:[%s194 + $0x60] sm:$0xf]
        %v228 = vld [vmem:[%s194 + $0x64] sm:$0xf]
        %v229 = vld [vmem:[%s194 + $0x68] sm:$0xf]
        %v230 = vld [vmem:[%s194 + $0x6c] sm:$0xf]
        %v231 = vld [vmem:[%s194 + $0x70] sm:$0xf]
        %v232 = vld [vmem:[%s194 + $0x74] sm:$0xf]
        %v233 = vld [vmem:[%s194 + $0x78] sm:$0xf]
        %v234 = vld [vmem:[%s194 + $0x7c] sm:$0xf]
        %v235 = vld [vmem:[#allocation2] sm:$0xf]
        %v236 = vld [vmem:[#allocation2 + $0x4] sm:$0xf]
        %v237 = vld [vmem:[#allocation4] sm:$0x1]
        %v239 = vlaneseq
        %v240 = vshrl.u32 %v239, 7
        %v241 = vsub.s32 0, %v240
        %v242 = vrot.slane %v237, %v241
        %v276 = vunpack.c.l.b16 %v203
        %v277 = vunpack.c.l.b16 %v204
        %v278 = vunpack.c.l.b16 %v205
        %v279 = vunpack.c.l.b16 %v206
        %v280 = vunpack.c.l.b16 %v207
        %v281 = vunpack.c.l.b16 %v208
        %v282 = vunpack.c.l.b16 %v209
        %v283 = vunpack.c.l.b16 %v210
        %v284 = vunpack.c.l.b16 %v211
        %v285 = vunpack.c.l.b16 %v212
        %v286 = vunpack.c.l.b16 %v213
        %v287 = vunpack.c.l.b16 %v214
        %v288 = vunpack.c.l.b16 %v215
        %v289 = vunpack.c.l.b16 %v216
        %v290 = vunpack.c.l.b16 %v217
        %v291 = vunpack.c.l.b16 %v218
        %v292 = vunpack.c.l.b16 %v219
        %v293 = vunpack.c.l.b16 %v220
        %v294 = vunpack.c.l.b16 %v221
        %v295 = vunpack.c.l.b16 %v222
        %v296 = vunpack.c.l.b16 %v223
        %v297 = vunpack.c.l.b16 %v224
        %v298 = vunpack.c.l.b16 %v225
        %v299 = vunpack.c.l.b16 %v226
        %v300 = vunpack.c.l.b16 %v227
        %v301 = vunpack.c.l.b16 %v228
        %v302 = vunpack.c.l.b16 %v229
        %v303 = vunpack.c.l.b16 %v230
        %v304 = vunpack.c.l.b16 %v231
        %v305 = vunpack.c.l.b16 %v232
        %v306 = vunpack.c.l.b16 %v233
        %v307 = vunpack.c.l.b16 %v234
        %v308 = vpack.c.b16 %v277, %v276
        %v309 = vpack.c.b16 %v279, %v278
        %v310 = vpack.c.b16 %v281, %v280
        %v311 = vpack.c.b16 %v283, %v282
        %v312 = vpack.c.b16 %v285, %v284
        %v313 = vpack.c.b16 %v287, %v286
        %v314 = vpack.c.b16 %v289, %v288
        %v315 = vpack.c.b16 %v291, %v290
        %v316 = vpack.c.b16 %v293, %v292
        %v317 = vpack.c.b16 %v295, %v294
        %v318 = vpack.c.b16 %v297, %v296
        %v319 = vpack.c.b16 %v299, %v298
        %v320 = vpack.c.b16 %v301, %v300
        %v321 = vpack.c.b16 %v303, %v302
        %v322 = vpack.c.b16 %v305, %v304
        %v323 = vpack.c.b16 %v307, %v306
        %v326 = vunpack.c.l.b16 %v235
        %v327 = vunpack.c.l.b16 %v236
        %v328 = vpack.c.b16 %v327, %v326
        %vm330 = vcmask 130048
        %v332 = vsel %vm330, %v308, 0
        %v335 = vsel %vm330, %v309, 0
        %v338 = vsel %vm330, %v310, 0
        %v341 = vsel %vm330, %v311, 0
        %v344 = vsel %vm330, %v312, 0
        %v347 = vsel %vm330, %v313, 0
        %v350 = vsel %vm330, %v314, 0
        %v353 = vsel %vm330, %v315, 0
        %v356 = vsel %vm330, %v316, 0
        %v359 = vsel %vm330, %v317, 0
        %v362 = vsel %vm330, %v318, 0
        %v365 = vsel %vm330, %v319, 0
        %v368 = vsel %vm330, %v320, 0
        %v371 = vsel %vm330, %v321, 0
        %v374 = vsel %vm330, %v322, 0
        %v377 = vsel %vm330, %v323, 0
        %379 = vmatprep.subr.bf16.mxu0 0
        %380 = vmatpush1.bf16.msra.mxu0 0
        %381 = vmatprep.subr.bf16.mxu0 0
        %382 = vmatpush1.bf16.msra.mxu0 0
        %383 = vmatprep.subr.bf16.mxu0 0
        %384 = vmatpush1.bf16.msra.mxu0 0
        %385 = vmatprep.subr.bf16.mxu0 0
        %386 = vmatpush1.bf16.msra.mxu0 0
        %387 = vmatprep.subr.bf16.mxu0 0
        %388 = vmatpush1.bf16.msra.mxu0 0
        %389 = vmatprep.subr.bf16.mxu0 0
        %390 = vmatpush1.bf16.msra.mxu0 0
        %391 = vmatprep.subr.bf16.mxu0 0
        %392 = vmatpush1.bf16.msra.mxu0 0
        %393 = vmatprep.subr.bf16.mxu0 0
        %394 = vmatpush1.bf16.msra.mxu0 %v328
        %395 = vmatprep.subr.bf16.mxu0 0
        %396 = vmatpush2.bf16.msra.mxu0 0
        %397 = vmatprep.subr.bf16.mxu0 0
        %398 = vmatpush2.bf16.msra.mxu0 0
        %399 = vmatprep.subr.bf16.mxu0 0
        %400 = vmatpush2.bf16.msra.mxu0 0
        %401 = vmatprep.subr.bf16.mxu0 0
        %402 = vmatpush2.bf16.msra.mxu0 0
        %403 = vmatprep.subr.bf16.mxu0 0
        %404 = vmatpush2.bf16.msra.mxu0 0
        %405 = vmatprep.subr.bf16.mxu0 0
        %406 = vmatpush2.bf16.msra.mxu0 0
        %407 = vmatprep.subr.bf16.mxu0 0
        %408 = vmatpush2.bf16.msra.mxu0 0
        %409 = vmatprep.subr.bf16.mxu0 0
        %410 = vmatpush2.bf16.msra.mxu0 0
        %411 = vmatprep.mubr.bf16.mxu0 0
        %412 = vmatmul.mubr.bf16.gmra.mxu0 %v332
        %v413 = vpop.f32.mrf.mxu0
        %v414 = vadd.f32 %v242, %v413
        %v415 = vpop.f32.mrf.mxu0
        %v416 = vpop.f32.mrf.mxu0
        %v417 = vadd.f32 %v242, %v416
        %v418 = vpop.f32.mrf.mxu0
        %419 = vmatprep.mubr.bf16.mxu0 0
        %420 = vmatmul.mubr.bf16.gmra.mxu0 %v335
        %v421 = vpop.f32.mrf.mxu0
        %v422 = vadd.f32 %v242, %v421
        %v423 = vpop.f32.mrf.mxu0
        %v424 = vpop.f32.mrf.mxu0
        %v425 = vadd.f32 %v242, %v424
        %v426 = vpop.f32.mrf.mxu0
        %427 = vmatprep.mubr.bf16.mxu0 0
        %428 = vmatmul.mubr.bf16.gmra.mxu0 %v338
        %v429 = vpop.f32.mrf.mxu0
        %v430 = vadd.f32 %v242, %v429
        %v431 = vpop.f32.mrf.mxu0
        %v432 = vpop.f32.mrf.mxu0
        %v433 = vadd.f32 %v242, %v432
        %v434 = vpop.f32.mrf.mxu0
        %435 = vmatprep.mubr.bf16.mxu0 0
        %436 = vmatmul.mubr.bf16.gmra.mxu0 %v341
        %v437 = vpop.f32.mrf.mxu0
        %v438 = vadd.f32 %v242, %v437
        %v439 = vpop.f32.mrf.mxu0
        %v440 = vpop.f32.mrf.mxu0
        %v441 = vadd.f32 %v242, %v440
        %v442 = vpop.f32.mrf.mxu0
        %443 = vmatprep.mubr.bf16.mxu0 0
        %444 = vmatmul.mubr.bf16.gmra.mxu0 %v344
        %v445 = vpop.f32.mrf.mxu0
        %v446 = vadd.f32 %v242, %v445
        %v447 = vpop.f32.mrf.mxu0
        %v448 = vpop.f32.mrf.mxu0
        %v449 = vadd.f32 %v242, %v448
        %v450 = vpop.f32.mrf.mxu0
        %451 = vmatprep.mubr.bf16.mxu0 0
        %452 = vmatmul.mubr.bf16.gmra.mxu0 %v347
        %v453 = vpop.f32.mrf.mxu0
        %v454 = vadd.f32 %v242, %v453
        %v455 = vpop.f32.mrf.mxu0
        %v456 = vpop.f32.mrf.mxu0
        %v457 = vadd.f32 %v242, %v456
        %v458 = vpop.f32.mrf.mxu0
        %459 = vmatprep.mubr.bf16.mxu0 0
        %460 = vmatmul.mubr.bf16.gmra.mxu0 %v350
        %v461 = vpop.f32.mrf.mxu0
        %v462 = vadd.f32 %v242, %v461
        %v463 = vpop.f32.mrf.mxu0
        %v464 = vpop.f32.mrf.mxu0
        %v465 = vadd.f32 %v242, %v464
        %v466 = vpop.f32.mrf.mxu0
        %467 = vmatprep.mubr.bf16.mxu0 0
        %468 = vmatmul.mubr.bf16.gmra.mxu0 %v353
        %v469 = vpop.f32.mrf.mxu0
        %v470 = vadd.f32 %v242, %v469
        %v471 = vpop.f32.mrf.mxu0
        %v472 = vpop.f32.mrf.mxu0
        %v473 = vadd.f32 %v242, %v472
        %v474 = vpop.f32.mrf.mxu0
        %475 = vmatprep.mubr.bf16.mxu0 0
        %476 = vmatmul.mubr.bf16.gmra.mxu0 %v356
        %v477 = vpop.f32.mrf.mxu0
        %v478 = vadd.f32 %v242, %v477
        %v479 = vpop.f32.mrf.mxu0
        %v480 = vpop.f32.mrf.mxu0
        %v481 = vadd.f32 %v242, %v480
        %v482 = vpop.f32.mrf.mxu0
        %483 = vmatprep.mubr.bf16.mxu0 0
        %484 = vmatmul.mubr.bf16.gmra.mxu0 %v359
        %v485 = vpop.f32.mrf.mxu0
        %v486 = vadd.f32 %v242, %v485
        %v487 = vpop.f32.mrf.mxu0
        %v488 = vpop.f32.mrf.mxu0
        %v489 = vadd.f32 %v242, %v488
        %v490 = vpop.f32.mrf.mxu0
        %491 = vmatprep.mubr.bf16.mxu0 0
        %492 = vmatmul.mubr.bf16.gmra.mxu0 %v362
        %v493 = vpop.f32.mrf.mxu0
        %v494 = vadd.f32 %v242, %v493
        %v495 = vpop.f32.mrf.mxu0
        %v496 = vpop.f32.mrf.mxu0
        %v497 = vadd.f32 %v242, %v496
        %v498 = vpop.f32.mrf.mxu0
        %499 = vmatprep.mubr.bf16.mxu0 0
        %500 = vmatmul.mubr.bf16.gmra.mxu0 %v365
        %v501 = vpop.f32.mrf.mxu0
        %v502 = vadd.f32 %v242, %v501
        %v503 = vpop.f32.mrf.mxu0
        %v504 = vpop.f32.mrf.mxu0
        %v505 = vadd.f32 %v242, %v504
        %v506 = vpop.f32.mrf.mxu0
        %507 = vmatprep.mubr.bf16.mxu0 0
        %508 = vmatmul.mubr.bf16.gmra.mxu0 %v368
        %v509 = vpop.f32.mrf.mxu0
        %v510 = vadd.f32 %v242, %v509
        %v511 = vpop.f32.mrf.mxu0
        %v512 = vpop.f32.mrf.mxu0
        %v513 = vadd.f32 %v242, %v512
        %v514 = vpop.f32.mrf.mxu0
        %515 = vmatprep.mubr.bf16.mxu0 0
        %516 = vmatmul.mubr.bf16.gmra.mxu0 %v371
        %v517 = vpop.f32.mrf.mxu0
        %v518 = vadd.f32 %v242, %v517
        %v519 = vpop.f32.mrf.mxu0
        %v520 = vpop.f32.mrf.mxu0
        %v521 = vadd.f32 %v242, %v520
        %v522 = vpop.f32.mrf.mxu0
        %523 = vmatprep.mubr.bf16.mxu0 0
        %524 = vmatmul.mubr.bf16.gmra.mxu0 %v374
        %v525 = vpop.f32.mrf.mxu0
        %v526 = vadd.f32 %v242, %v525
        %v527 = vpop.f32.mrf.mxu0
        %v528 = vpop.f32.mrf.mxu0
        %v529 = vadd.f32 %v242, %v528
        %v530 = vpop.f32.mrf.mxu0
        %531 = vmatprep.mubr.bf16.mxu0 0
        %532 = vmatmul.mubr.bf16.gmra.mxu0 %v377
        %v533 = vpop.f32.mrf.mxu0
        %v534 = vadd.f32 %v242, %v533
        %v535 = vpop.f32.mrf.mxu0
        %v536 = vpop.f32.mrf.mxu0
        %v537 = vadd.f32 %v242, %v536
        %v538 = vpop.f32.mrf.mxu0
        %539 = vdwg.mxu0
        %v540 = vmax.f32 %v414, 0.0
        %v541 = vmax.f32 %v417, 0.0
        %v542 = vmax.f32 %v422, 0.0
        %v543 = vmax.f32 %v425, 0.0
        %v544 = vmax.f32 %v430, 0.0
        %v545 = vmax.f32 %v433, 0.0
        %v546 = vmax.f32 %v438, 0.0
        %v547 = vmax.f32 %v441, 0.0
        %v548 = vmax.f32 %v446, 0.0
        %v549 = vmax.f32 %v449, 0.0
        %v550 = vmax.f32 %v454, 0.0
        %v551 = vmax.f32 %v457, 0.0
        %v552 = vmax.f32 %v462, 0.0
        %v553 = vmax.f32 %v465, 0.0
        %v554 = vmax.f32 %v470, 0.0
        %v555 = vmax.f32 %v473, 0.0
        %v556 = vmax.f32 %v478, 0.0
        %v557 = vmax.f32 %v481, 0.0
        %v558 = vmax.f32 %v486, 0.0
        %v559 = vmax.f32 %v489, 0.0
        %v560 = vmax.f32 %v494, 0.0
        %v561 = vmax.f32 %v497, 0.0
        %v562 = vmax.f32 %v502, 0.0
        %v563 = vmax.f32 %v505, 0.0
        %v564 = vmax.f32 %v510, 0.0
        %v565 = vmax.f32 %v513, 0.0
        %v566 = vmax.f32 %v518, 0.0
        %v567 = vmax.f32 %v521, 0.0
        %v568 = vmax.f32 %v526, 0.0
        %v569 = vmax.f32 %v529, 0.0
        %v570 = vmax.f32 %v534, 0.0
        %v571 = vmax.f32 %v537, 0.0
        %v572 = vpack.c.bf16 %v541, %v540
        %v573 = vpack.c.bf16 %v543, %v542
        %v574 = vpack.c.bf16 %v545, %v544
        %v575 = vpack.c.bf16 %v547, %v546
        %v576 = vpack.c.bf16 %v549, %v548
        %v577 = vpack.c.bf16 %v551, %v550
        %v578 = vpack.c.bf16 %v553, %v552
        %v579 = vpack.c.bf16 %v555, %v554
        %v580 = vpack.c.bf16 %v557, %v556
        %v581 = vpack.c.bf16 %v559, %v558
        %v582 = vpack.c.bf16 %v561, %v560
        %v583 = vpack.c.bf16 %v563, %v562
        %v584 = vpack.c.bf16 %v565, %v564
        %v585 = vpack.c.bf16 %v567, %v566
        %v586 = vpack.c.bf16 %v569, %v568
        %v587 = vpack.c.bf16 %v571, %v570
        %v604 = vunpack.c.l.b16 %v572
        %v605 = vunpack.c.h.b16 %v572
        %v606 = vunpack.c.l.b16 %v573
        %v607 = vunpack.c.h.b16 %v573
        %v608 = vunpack.c.l.b16 %v574
        %v609 = vunpack.c.h.b16 %v574
        %v610 = vunpack.c.l.b16 %v575
        %v611 = vunpack.c.h.b16 %v575
        %v612 = vunpack.c.l.b16 %v576
        %v613 = vunpack.c.h.b16 %v576
        %v614 = vunpack.c.l.b16 %v577
        %v615 = vunpack.c.h.b16 %v577
        %v616 = vunpack.c.l.b16 %v578
        %v617 = vunpack.c.h.b16 %v578
        %v618 = vunpack.c.l.b16 %v579
        %v619 = vunpack.c.h.b16 %v579
        %v620 = vunpack.c.l.b16 %v580
        %v621 = vunpack.c.h.b16 %v580
        %v622 = vunpack.c.l.b16 %v581
        %v623 = vunpack.c.h.b16 %v581
        %v624 = vunpack.c.l.b16 %v582
        %v625 = vunpack.c.h.b16 %v582
        %v626 = vunpack.c.l.b16 %v583
        %v627 = vunpack.c.h.b16 %v583
        %v628 = vunpack.c.l.b16 %v584
        %v629 = vunpack.c.h.b16 %v584
        %v630 = vunpack.c.l.b16 %v585
        %v631 = vunpack.c.h.b16 %v585
        %v632 = vunpack.c.l.b16 %v586
        %v633 = vunpack.c.h.b16 %v586
        %v634 = vunpack.c.l.b16 %v587
        %v635 = vunpack.c.h.b16 %v587
        %v636 = vpack.c.b16 %v604, %v604
        %v637 = vpack.c.b16 %v605, %v605
        %v638 = vpack.c.b16 %v606, %v606
        %v639 = vpack.c.b16 %v607, %v607
        %v640 = vpack.c.b16 %v608, %v608
        %v641 = vpack.c.b16 %v609, %v609
        %v642 = vpack.c.b16 %v610, %v610
        %v643 = vpack.c.b16 %v611, %v611
        %v644 = vpack.c.b16 %v612, %v612
        %v645 = vpack.c.b16 %v613, %v613
        %v646 = vpack.c.b16 %v614, %v614
        %v647 = vpack.c.b16 %v615, %v615
        %v648 = vpack.c.b16 %v616, %v616
        %v649 = vpack.c.b16 %v617, %v617
        %v650 = vpack.c.b16 %v618, %v618
        %v651 = vpack.c.b16 %v619, %v619
        %v652 = vpack.c.b16 %v620, %v620
        %v653 = vpack.c.b16 %v621, %v621
        %v654 = vpack.c.b16 %v622, %v622
        %v655 = vpack.c.b16 %v623, %v623
        %v656 = vpack.c.b16 %v624, %v624
        %v657 = vpack.c.b16 %v625, %v625
        %v658 = vpack.c.b16 %v626, %v626
        %v659 = vpack.c.b16 %v627, %v627
        %v660 = vpack.c.b16 %v628, %v628
        %v661 = vpack.c.b16 %v629, %v629
        %v662 = vpack.c.b16 %v630, %v630
        %v663 = vpack.c.b16 %v631, %v631
        %v664 = vpack.c.b16 %v632, %v632
        %v665 = vpack.c.b16 %v633, %v633
        %v666 = vpack.c.b16 %v634, %v634
        %v667 = vpack.c.b16 %v635, %v635
        %vm700 = vcmask 27648
        %701 = vst.msk [vmem:[%s200] sm:$0xf] %vm700, %v636
        %702 = vst.msk [vmem:[%s200 + $0x4] sm:$0xf] %vm700, %v637
        %703 = vst.msk [vmem:[%s200 + $0x8] sm:$0xf] %vm700, %v638
        %704 = vst.msk [vmem:[%s200 + $0xc] sm:$0xf] %vm700, %v639
        %705 = vst.msk [vmem:[%s200 + $0x10] sm:$0xf] %vm700, %v640
        %706 = vst.msk [vmem:[%s200 + $0x14] sm:$0xf] %vm700, %v641
        %707 = vst.msk [vmem:[%s200 + $0x18] sm:$0xf] %vm700, %v642
        %708 = vst.msk [vmem:[%s200 + $0x1c] sm:$0xf] %vm700, %v643
        %709 = vst.msk [vmem:[%s200 + $0x20] sm:$0xf] %vm700, %v644
        %710 = vst.msk [vmem:[%s200 + $0x24] sm:$0xf] %vm700, %v645
        %711 = vst.msk [vmem:[%s200 + $0x28] sm:$0xf] %vm700, %v646
        %712 = vst.msk [vmem:[%s200 + $0x2c] sm:$0xf] %vm700, %v647
        %713 = vst.msk [vmem:[%s200 + $0x30] sm:$0xf] %vm700, %v648
        %714 = vst.msk [vmem:[%s200 + $0x34] sm:$0xf] %vm700, %v649
        %715 = vst.msk [vmem:[%s200 + $0x38] sm:$0xf] %vm700, %v650
        %716 = vst.msk [vmem:[%s200 + $0x3c] sm:$0xf] %vm700, %v651
        %717 = vst.msk [vmem:[%s200 + $0x40] sm:$0xf] %vm700, %v652
        %718 = vst.msk [vmem:[%s200 + $0x44] sm:$0xf] %vm700, %v653
        %719 = vst.msk [vmem:[%s200 + $0x48] sm:$0xf] %vm700, %v654
        %720 = vst.msk [vmem:[%s200 + $0x4c] sm:$0xf] %vm700, %v655
        %721 = vst.msk [vmem:[%s200 + $0x50] sm:$0xf] %vm700, %v656
        %722 = vst.msk [vmem:[%s200 + $0x54] sm:$0xf] %vm700, %v657
        %723 = vst.msk [vmem:[%s200 + $0x58] sm:$0xf] %vm700, %v658
        %724 = vst.msk [vmem:[%s200 + $0x5c] sm:$0xf] %vm700, %v659
        %725 = vst.msk [vmem:[%s200 + $0x60] sm:$0xf] %vm700, %v660
        %726 = vst.msk [vmem:[%s200 + $0x64] sm:$0xf] %vm700, %v661
        %727 = vst.msk [vmem:[%s200 + $0x68] sm:$0xf] %vm700, %v662
        %728 = vst.msk [vmem:[%s200 + $0x6c] sm:$0xf] %vm700, %v663
        %729 = vst.msk [vmem:[%s200 + $0x70] sm:$0xf] %vm700, %v664
        %730 = vst.msk [vmem:[%s200 + $0x74] sm:$0xf] %vm700, %v665
        %731 = vst.msk [vmem:[%s200 + $0x78] sm:$0xf] %vm700, %v666
        %732 = vst.msk [vmem:[%s200 + $0x7c] sm:$0xf] %vm700, %v667
        %s733 = smul.u32 32, %s16
        %p734 = scmp.lt.s32.totalorder %s733, 63
        %s735 = scalar_select %p734, %s733, 63
        %s736 = smul.addr %s735, 4
        %s737 = scalar_lea.vmem %s3, %s736
        // Predicated region
        $region41: #{_lambda_.2} parent=31 // pred_check
          %p738 = pneg %p102
        $region42: #{_lambda_.2} parent=31 // pred_check_branch
          %740 = sbr.rel (%p738) target = $region44
        $region43: #{_lambda_.2} parent=31 // pred_region
          %s741 = smul.u32 32, %s16
        $region44: #{_lambda_.2} parent=31 // pred_fallthru
          _
      $region32: #{_lambda_.2} parent=5 // pred_fallthru
        _
      %p742 = scmp.le.s32.totalorder 2, %s11
      // Predicated region
      $region45: #{_lambda_.2} parent=5 // pred_check
        %p743 = pneg %p742
      $region46: #{_lambda_.2} parent=5 // pred_check_branch
        %745 = sbr.rel (%p743) target = $region48
      $region47: #{_lambda_.2} parent=5 // pred_region
        %s746 = ssub.s32 %s11, 2
        // Predicated region
        $region49: #{_lambda_.2} parent=47 // pred_check
          %p747 = pneg %p108
        $region50: #{_lambda_.2} parent=47 // pred_check_branch
          %749 = sbr.rel (%p747) target = $region52
        $region51: #{_lambda_.2} parent=47 // pred_region
          %s750 = smul.u32 32, %s17
          %p751 = scmp.lt.s32.totalorder %s750, 63
          %s752 = scalar_select %p751, %s750, 63
          %s753 = smul.addr %s752, 4
          %s754 = scalar_lea.vmem %s3, %s753
        $region52: #{_lambda_.2} parent=47 // pred_fallthru
          _
      $region48: #{_lambda_.2} parent=5 // pred_fallthru
        _
    $region6: #{_lambda_.2} parent=1 // loop_footer
      %s15 = sadd.s32 1, %s11
    $region7: #{_lambda_.2} parent=1 // loop_footer_branch
      %10 = sbr.rel target = $region3
    $region8: #{_lambda_.2} parent=1 // loop_exit
      _
    %755 = vsyncpa [#allocation3], 1
    %s756 = scalar_lea.sflag [#allocation3], 1
    %757 = vsyncpa %s756, 1
    %758 = vsyncpa [#allocation5], 1

// kernel: _lambda_.3
$region0: #{_lambda_.3}
  #allocation0 [shape = 'u32[]', space=smem, size = 0x4, offset = 0x4, fixed_abs, tag = 'smem constant byte address 0x4 - core index']
  #allocation1 [shape = 'u32[144,128]{1,0:T(1,128)}', space=vmem, size = 0x12000, scoped, tag = 'internal scratch']
  %s0 = inlined_call_operand.vmem [shape: bf16[512,36], index: 0, kind: input, shape index: {}]
  %s1 = inlined_call_operand.vmem [shape: bf16[36,4], index: 1, kind: input, shape index: {}]
  %s2 = inlined_call_operand.vmem [shape: f32[1,4], index: 2, kind: input, shape index: {}]
  %s3 = inlined_call_operand.vmem [shape: bf16[4,16], index: 3, kind: input, shape index: {}]
  %s4 = inlined_call_operand.vmem [shape: f32[1,16], index: 4, kind: input, shape index: {}]
  %s5 = inlined_call_operand.vmem [shape: bf16[512,16], index: 5, kind: input, shape index: {}]
  %s6 = inlined_call_operand.vmem [shape: f32[512,16], index: 6, kind: output, shape index: {}]
  %s7 = sld [smem:[#allocation0]]
  $region57: #{_lambda_.3} parent=0
    _
  %s9 = ssub.s32 1, %s7
  %s10 = scalar_select 0, %s9, %s7
  loop: start=0, step=1, limit=4
  $region2: #{_lambda_.3} parent=0 // loop_pre_header
    _
  $region3: #{_lambda_.3} parent=0 // loop_header
    %s12 = sphi 0, %s16
    %p13 = scmp.ge.s32.totalorder %s12, 4
    %s22 = sphi 0, %s24
    %s25 = sphi 0, %s22
    %s26 = sphi 0, %s25
    %s42 = sphi 0, %s26
    %s46 = sphi 0, %s46
    %s48 = sphi 0, %s46
    %s49 = sphi 0, %s48
    %s63 = sphi 0, %s49
    %s67 = sphi 0, %s67
    %s69 = sphi 0, %s67
    %s70 = sphi 0, %s69
    %s84 = sphi 0, %s70
    %s88 = sphi 0, %s88
    %s90 = sphi 0, %s88
    %s91 = sphi 0, %s90
    %s105 = sphi 0, %s91
    %s109 = sphi 0, %s109
    %s111 = sphi 0, %s109
    %s112 = sphi 0, %s111
    %s126 = sphi 0, %s112
    %s132 = sphi 0, %s134
    %s135 = sphi 0, %s132
    %s136 = sphi 0, %s135
    %s152 = sphi 0, %s136
    %s158 = sphi 0, %s160
    %s161 = sphi 0, %s158
    %s162 = sphi 0, %s161
    %s178 = sphi 0, %s162
  $region4: #{_lambda_.3} parent=0 // loop_header_branch
    %15 = sbr.rel (%p13) target = $region8
  $region5: #{_lambda_.3} parent=0 // loop_body
    %s17 = ssub.s32 %s12, 1
    %s18 = ssub.s32 %s12, 2
    %s19 = sadd.s32 %s12, 1
    %s20 = ssub.s32 %s12, %s19
    %p21 = scmp.eq.s32.totalorder %s20, 0
    %s23 = sadd.s32 %s22, 1
    %s24 = scalar_select %p21, %s22, %s23
    %p27 = pneg %p21
    %p28 = scmp.eq.s32.totalorder %s12, 1
    %p29 = por %p27, %p28
    %p30 = scmp.ne.s32.totalorder %s22, %s25
    %p31 = scmp.eq.s32.totalorder %s12, 0
    %p32 = por %p30, %p31
    %p33 = scmp.ne.s32.totalorder %s22, %s25
    %p34 = scmp.eq.s32.totalorder %s17, 1
    %p35 = por %p33, %p34
    %p36 = scmp.ne.s32.totalorder %s25, %s26
    %p37 = scmp.eq.s32.totalorder %s17, 0
    %p38 = por %p36, %p37
    %p39 = scmp.ne.s32.totalorder %s25, %s26
    %p40 = scmp.eq.s32.totalorder %s18, 1
    %p41 = por %p39, %p40
    %p43 = scmp.ne.s32.totalorder %s26, %s42
    %p44 = scmp.eq.s32.totalorder %s18, 0
    %p45 = por %p43, %p44
    %s47 = sadd.s32 %s46, 1
    %p50 = scmp.eq.s32.totalorder %s12, 1
    %p51 = scmp.ne.s32.totalorder %s46, %s48
    %p52 = scmp.eq.s32.totalorder %s12, 0
    %p53 = por %p51, %p52
    %p54 = scmp.ne.s32.totalorder %s46, %s48
    %p55 = scmp.eq.s32.totalorder %s17, 1
    %p56 = por %p54, %p55
    %p57 = scmp.ne.s32.totalorder %s48, %s49
    %p58 = scmp.eq.s32.totalorder %s17, 0
    %p59 = por %p57, %p58
    %p60 = scmp.ne.s32.totalorder %s48, %s49
    %p61 = scmp.eq.s32.totalorder %s18, 1
    %p62 = por %p60, %p61
    %p64 = scmp.ne.s32.totalorder %s49, %s63
    %p65 = scmp.eq.s32.totalorder %s18, 0
    %p66 = por %p64, %p65
    %s68 = sadd.s32 %s67, 1
    %p71 = scmp.eq.s32.totalorder %s12, 1
    %p72 = scmp.ne.s32.totalorder %s67, %s69
    %p73 = scmp.eq.s32.totalorder %s12, 0
    %p74 = por %p72, %p73
    %p75 = scmp.ne.s32.totalorder %s67, %s69
    %p76 = scmp.eq.s32.totalorder %s17, 1
    %p77 = por %p75, %p76
    %p78 = scmp.ne.s32.totalorder %s69, %s70
    %p79 = scmp.eq.s32.totalorder %s17, 0
    %p80 = por %p78, %p79
    %p81 = scmp.ne.s32.totalorder %s69, %s70
    %p82 = scmp.eq.s32.totalorder %s18, 1
    %p83 = por %p81, %p82
    %p85 = scmp.ne.s32.totalorder %s70, %s84
    %p86 = scmp.eq.s32.totalorder %s18, 0
    %p87 = por %p85, %p86
    %s89 = sadd.s32 %s88, 1
    %p92 = scmp.eq.s32.totalorder %s12, 1
    %p93 = scmp.ne.s32.totalorder %s88, %s90
    %p94 = scmp.eq.s32.totalorder %s12, 0
    %p95 = por %p93, %p94
    %p96 = scmp.ne.s32.totalorder %s88, %s90
    %p97 = scmp.eq.s32.totalorder %s17, 1
    %p98 = por %p96, %p97
    %p99 = scmp.ne.s32.totalorder %s90, %s91
    %p100 = scmp.eq.s32.totalorder %s17, 0
    %p101 = por %p99, %p100
    %p102 = scmp.ne.s32.totalorder %s90, %s91
    %p103 = scmp.eq.s32.totalorder %s18, 1
    %p104 = por %p102, %p103
    %p106 = scmp.ne.s32.totalorder %s91, %s105
    %p107 = scmp.eq.s32.totalorder %s18, 0
    %p108 = por %p106, %p107
    %s110 = sadd.s32 %s109, 1
    %p113 = scmp.eq.s32.totalorder %s12, 1
    %p114 = scmp.ne.s32.totalorder %s109, %s111
    %p115 = scmp.eq.s32.totalorder %s12, 0
    %p116 = por %p114, %p115
    %p117 = scmp.ne.s32.totalorder %s109, %s111
    %p118 = scmp.eq.s32.totalorder %s17, 1
    %p119 = por %p117, %p118
    %p120 = scmp.ne.s32.totalorder %s111, %s112
    %p121 = scmp.eq.s32.totalorder %s17, 0
    %p122 = por %p120, %p121
    %p123 = scmp.ne.s32.totalorder %s111, %s112
    %p124 = scmp.eq.s32.totalorder %s18, 1
    %p125 = por %p123, %p124
    %p127 = scmp.ne.s32.totalorder %s112, %s126
    %p128 = scmp.eq.s32.totalorder %s18, 0
    %p129 = por %p127, %p128
    %s130 = ssub.s32 %s12, %s19
    %p131 = scmp.eq.s32.totalorder %s130, 0
    %s133 = sadd.s32 %s132, 1
    %s134 = scalar_select %p131, %s132, %s133
    %p137 = pneg %p131
    %p138 = scmp.eq.s32.totalorder %s12, 1
    %p139 = por %p137, %p138
    %p140 = scmp.ne.s32.totalorder %s132, %s135
    %p141 = scmp.eq.s32.totalorder %s12, 0
    %p142 = por %p140, %p141
    %p143 = scmp.ne.s32.totalorder %s132, %s135
    %p144 = scmp.eq.s32.totalorder %s17, 1
    %p145 = por %p143, %p144
    %p146 = scmp.ne.s32.totalorder %s135, %s136
    %p147 = scmp.eq.s32.totalorder %s17, 0
    %p148 = por %p146, %p147
    %p149 = scmp.ne.s32.totalorder %s135, %s136
    %p150 = scmp.eq.s32.totalorder %s18, 1
    %p151 = por %p149, %p150
    %p153 = scmp.ne.s32.totalorder %s136, %s152
    %p154 = scmp.eq.s32.totalorder %s18, 0
    %p155 = por %p153, %p154
    %s156 = ssub.s32 %s12, %s19
    %p157 = scmp.eq.s32.totalorder %s156, 0
    %s159 = sadd.s32 %s158, 1
    %s160 = scalar_select %p157, %s158, %s159
    %p163 = pneg %p157
    %p164 = scmp.eq.s32.totalorder %s12, 1
    %p165 = por %p163, %p164
    %p166 = scmp.ne.s32.totalorder %s158, %s161
    %p167 = scmp.eq.s32.totalorder %s12, 0
    %p168 = por %p166, %p167
    %p169 = scmp.ne.s32.totalorder %s158, %s161
    %p170 = scmp.eq.s32.totalorder %s17, 1
    %p171 = por %p169, %p170
    %p172 = scmp.ne.s32.totalorder %s161, %s162
    %p173 = scmp.eq.s32.totalorder %s17, 0
    %p174 = por %p172, %p173
    %p175 = scmp.ne.s32.totalorder %s161, %s162
    %p176 = scmp.eq.s32.totalorder %s18, 1
    %p177 = por %p175, %p176
    %p179 = scmp.ne.s32.totalorder %s162, %s178
    %p180 = scmp.eq.s32.totalorder %s18, 0
    %p181 = por %p179, %p180
    %p182 = scmp.le.s32.totalorder 1, %s12
    %p183 = scmp.lt.s32.totalorder %s12, 3
    %p184 = pnand %p182, %p183
    %p185 = pneg %p184
    // Predicated region
    $region9: #{_lambda_.3} parent=5 // pred_check
      _
    $region10: #{_lambda_.3} parent=5 // pred_check_branch
      %187 = sbr.rel (%p184) target = $region12
    $region11: #{_lambda_.3} parent=5 // pred_region
      %s188 = ssub.s32 %s12, 1
      // Predicated region
      $region13: #{_lambda_.3} parent=11 // pred_check
        %p189 = pneg %p59
      $region14: #{_lambda_.3} parent=11 // pred_check_branch
        %191 = sbr.rel (%p189) target = $region16
      $region15: #{_lambda_.3} parent=11 // pred_region
        _
      $region16: #{_lambda_.3} parent=11 // pred_fallthru
        _
      // Predicated region
      $region17: #{_lambda_.3} parent=11 // pred_check
        %p192 = pneg %p80
      $region18: #{_lambda_.3} parent=11 // pred_check_branch
        %194 = sbr.rel (%p192) target = $region20
      $region19: #{_lambda_.3} parent=11 // pred_region
        _
      $region20: #{_lambda_.3} parent=11 // pred_fallthru
        _
      // Predicated region
      $region21: #{_lambda_.3} parent=11 // pred_check
        %p195 = pneg %p101
      $region22: #{_lambda_.3} parent=11 // pred_check_branch
        %197 = sbr.rel (%p195) target = $region24
      $region23: #{_lambda_.3} parent=11 // pred_region
        _
      $region24: #{_lambda_.3} parent=11 // pred_fallthru
        _
      // Predicated region
      $region25: #{_lambda_.3} parent=11 // pred_check
        %p198 = pneg %p122
      $region26: #{_lambda_.3} parent=11 // pred_check_branch
        %200 = sbr.rel (%p198) target = $region28
      $region27: #{_lambda_.3} parent=11 // pred_region
        _
      $region28: #{_lambda_.3} parent=11 // pred_fallthru
        _
    $region12: #{_lambda_.3} parent=5 // pred_fallthru
      _
    %p201 = scmp.lt.s32.totalorder %s12, 2
    // Predicated region
    $region29: #{_lambda_.3} parent=5 // pred_check
      %p202 = pneg %p201
    $region30: #{_lambda_.3} parent=5 // pred_check_branch
      %204 = sbr.rel (%p202) target = $region32
    $region31: #{_lambda_.3} parent=5 // pred_region
      // Predicated region
      $region33: #{_lambda_.3} parent=31 // pred_check
        %p205 = pneg %p32
      $region34: #{_lambda_.3} parent=31 // pred_check_branch
        %207 = sbr.rel (%p205) target = $region36
      $region35: #{_lambda_.3} parent=31 // pred_region
        %s208 = smul.u32 32, %s12
        %p209 = scmp.lt.s32.totalorder %s208, 63
        %s210 = scalar_select %p209, %s208, 63
        %s211 = smul.addr %s210, 4
        %s212 = scalar_lea.vmem %s0, %s211
        %s213 = smul.u32 32, %s12
      $region36: #{_lambda_.3} parent=31 // pred_fallthru
        _
      // Predicated region
      $region37: #{_lambda_.3} parent=31 // pred_check
        %p214 = pneg %p142
      $region38: #{_lambda_.3} parent=31 // pred_check_branch
        %216 = sbr.rel (%p214) target = $region40
      $region39: #{_lambda_.3} parent=31 // pred_region
        %s217 = smul.u32 32, %s12
        %p218 = scmp.lt.s32.totalorder %s217, 63
        %s219 = scalar_select %p218, %s217, 63
        %s220 = smul.addr %s219, 4
        %s221 = scalar_lea.vmem %s5, %s220
        %s222 = smul.u32 32, %s12
      $region40: #{_lambda_.3} parent=31 // pred_fallthru
        _
    $region32: #{_lambda_.3} parent=5 // pred_fallthru
      _
    %p223 = scmp.le.s32.totalorder 1, %s12
    %p224 = scmp.lt.s32.totalorder %s12, 3
    %p225 = pnand %p223, %p224
    %p226 = pneg %p225
    // Predicated region
    $region41: #{_lambda_.3} parent=5 // pred_check
      _
    $region42: #{_lambda_.3} parent=5 // pred_check_branch
      %228 = sbr.rel (%p225) target = $region44
    $region43: #{_lambda_.3} parent=5 // pred_region
      %s229 = ssub.s32 %s12, 1
      %s230 = smul.u32 32, %s17
      %p231 = scmp.lt.s32.totalorder %s230, 63
      %s232 = scalar_select %p231, %s230, 63
      %s233 = smul.addr %s232, 4
      %s234 = scalar_lea.vmem %s0, %s233
      %p235 = pneg %p38
      %p236 = pneg %p35
      %p237 = pneg %p59
      %p238 = pneg %p56
      %p239 = pneg %p80
      %p240 = pneg %p77
      %p241 = pneg %p101
      %p242 = pneg %p98
      %p243 = pneg %p122
      %p244 = pneg %p119
      %s245 = smul.u32 32, %s17
      %p246 = scmp.lt.s32.totalorder %s245, 63
      %s247 = scalar_select %p246, %s245, 63
      %s248 = smul.addr %s247, 4
      %s249 = scalar_lea.vmem %s5, %s248
      %p250 = pneg %p148
      %p251 = pneg %p145
      %p252 = pneg %p174
      %p253 = pneg %p171
      %s254 = smul.u32 32, %s17
      %p255 = scmp.lt.s32.totalorder %s254, 63
      %s256 = scalar_select %p255, %s254, 63
      %s257 = smul.addr %s256, 8
      %s258 = scalar_lea.vmem %s6, %s257
      %s259 = smul.u32 32, %s17
      %p260 = scmp.lt.s32.totalorder %s259, 63
      %s261 = scalar_select %p260, %s259, 63
      %s262 = smul.addr %s261, 4
      %s263 = scalar_lea.vmem %s0, %s262
      %s264 = smul.u32 32, %s17
      %s265 = smul.u32 32, %s17
      %p266 = scmp.lt.s32.totalorder %s265, 63
      %s267 = scalar_select %p266, %s265, 63
      %s268 = smul.addr %s267, 4
      %s269 = scalar_lea.vmem %s5, %s268
      %s270 = smul.u32 32, %s17
      %s271 = smul.u32 32, %s17
      %p272 = scmp.lt.s32.totalorder %s271, 63
      %s273 = scalar_select %p272, %s271, 63
      %s274 = smul.addr %s273, 8
      %s275 = scalar_lea.vmem %s6, %s274
      %s276 = smul.u32 32, %s17
      %v278 = vld [vmem:[%s263] sm:$0xf]
      %v279 = vld [vmem:[%s263 + $0x4] sm:$0xf]
      %v280 = vld [vmem:[%s263 + $0x8] sm:$0xf]
      %v281 = vld [vmem:[%s263 + $0xc] sm:$0xf]
      %v282 = vld [vmem:[%s263 + $0x10] sm:$0xf]
      %v283 = vld [vmem:[%s263 + $0x14] sm:$0xf]
      %v284 = vld [vmem:[%s263 + $0x18] sm:$0xf]
      %v285 = vld [vmem:[%s263 + $0x1c] sm:$0xf]
      %v286 = vld [vmem:[%s263 + $0x20] sm:$0xf]
      %v287 = vld [vmem:[%s263 + $0x24] sm:$0xf]
      %v288 = vld [vmem:[%s263 + $0x28] sm:$0xf]
      %v289 = vld [vmem:[%s263 + $0x2c] sm:$0xf]
      %v290 = vld [vmem:[%s263 + $0x30] sm:$0xf]
      %v291 = vld [vmem:[%s263 + $0x34] sm:$0xf]
      %v292 = vld [vmem:[%s263 + $0x38] sm:$0xf]
      %v293 = vld [vmem:[%s263 + $0x3c] sm:$0xf]
      %v294 = vld [vmem:[%s263 + $0x40] sm:$0xf]
      %v295 = vld [vmem:[%s263 + $0x44] sm:$0xf]
      %v296 = vld [vmem:[%s263 + $0x48] sm:$0xf]
      %v297 = vld [vmem:[%s263 + $0x4c] sm:$0xf]
      %v298 = vld [vmem:[%s263 + $0x50] sm:$0xf]
      %v299 = vld [vmem:[%s263 + $0x54] sm:$0xf]
      %v300 = vld [vmem:[%s263 + $0x58] sm:$0xf]
      %v301 = vld [vmem:[%s263 + $0x5c] sm:$0xf]
      %v302 = vld [vmem:[%s263 + $0x60] sm:$0xf]
      %v303 = vld [vmem:[%s263 + $0x64] sm:$0xf]
      %v304 = vld [vmem:[%s263 + $0x68] sm:$0xf]
      %v305 = vld [vmem:[%s263 + $0x6c] sm:$0xf]
      %v306 = vld [vmem:[%s263 + $0x70] sm:$0xf]
      %v307 = vld [vmem:[%s263 + $0x74] sm:$0xf]
      %v308 = vld [vmem:[%s263 + $0x78] sm:$0xf]
      %v309 = vld [vmem:[%s263 + $0x7c] sm:$0xf]
      %v310 = vld [vmem:[%s1] sm:$0xf]
      %v311 = vld [vmem:[%s1 + $0x4] sm:$0xf]
      %v312 = vld [vmem:[%s1 + $0x8] sm:$0xf]
      %v313 = vld [vmem:[%s1 + $0xc] sm:$0xf]
      %v314 = vld [vmem:[%s1 + $0x10] sm:$0x3]
      %v315 = vld [vmem:[%s2] sm:$0x1]
      %v317 = vlaneseq
      %v318 = vshrl.u32 %v317, 7
      %v319 = vsub.s32 0, %v318
      %v320 = vrot.slane %v315, %v319
      %v354 = vunpack.c.l.b16 %v278
      %v355 = vunpack.c.l.b16 %v279
      %v356 = vunpack.c.l.b16 %v280
      %v357 = vunpack.c.l.b16 %v281
      %v358 = vunpack.c.l.b16 %v282
      %v359 = vunpack.c.l.b16 %v283
      %v360 = vunpack.c.l.b16 %v284
      %v361 = vunpack.c.l.b16 %v285
      %v362 = vunpack.c.l.b16 %v286
      %v363 = vunpack.c.l.b16 %v287
      %v364 = vunpack.c.l.b16 %v288
      %v365 = vunpack.c.l.b16 %v289
      %v366 = vunpack.c.l.b16 %v290
      %v367 = vunpack.c.l.b16 %v291
      %v368 = vunpack.c.l.b16 %v292
      %v369 = vunpack.c.l.b16 %v293
      %v370 = vunpack.c.l.b16 %v294
      %v371 = vunpack.c.l.b16 %v295
      %v372 = vunpack.c.l.b16 %v296
      %v373 = vunpack.c.l.b16 %v297
      %v374 = vunpack.c.l.b16 %v298
      %v375 = vunpack.c.l.b16 %v299
      %v376 = vunpack.c.l.b16 %v300
      %v377 = vunpack.c.l.b16 %v301
      %v378 = vunpack.c.l.b16 %v302
      %v379 = vunpack.c.l.b16 %v303
      %v380 = vunpack.c.l.b16 %v304
      %v381 = vunpack.c.l.b16 %v305
      %v382 = vunpack.c.l.b16 %v306
      %v383 = vunpack.c.l.b16 %v307
      %v384 = vunpack.c.l.b16 %v308
      %v385 = vunpack.c.l.b16 %v309
      %v386 = vpack.c.b16 %v355, %v354
      %v387 = vpack.c.b16 %v357, %v356
      %v388 = vpack.c.b16 %v359, %v358
      %v389 = vpack.c.b16 %v361, %v360
      %v390 = vpack.c.b16 %v363, %v362
      %v391 = vpack.c.b16 %v365, %v364
      %v392 = vpack.c.b16 %v367, %v366
      %v393 = vpack.c.b16 %v369, %v368
      %v394 = vpack.c.b16 %v371, %v370
      %v395 = vpack.c.b16 %v373, %v372
      %v396 = vpack.c.b16 %v375, %v374
      %v397 = vpack.c.b16 %v377, %v376
      %v398 = vpack.c.b16 %v379, %v378
      %v399 = vpack.c.b16 %v381, %v380
      %v400 = vpack.c.b16 %v383, %v382
      %v401 = vpack.c.b16 %v385, %v384
      %v407 = vunpack.c.l.b16 %v310
      %v408 = vunpack.c.l.b16 %v311
      %v409 = vunpack.c.l.b16 %v312
      %v410 = vunpack.c.l.b16 %v313
      %v411 = vunpack.c.l.b16 %v314
      %v412 = vpack.c.b16 %v408, %v407
      %v413 = vpack.c.b16 %v410, %v409
      %v414 = vpack.c.b16 %v411, %v411
      %vm417 = vcmask 293888
      %v419 = vsel %vm417, %v386, 0
      %v422 = vsel %vm417, %v387, 0
      %v425 = vsel %vm417, %v388, 0
      %v428 = vsel %vm417, %v389, 0
      %v431 = vsel %vm417, %v390, 0
      %v434 = vsel %vm417, %v391, 0
      %v437 = vsel %vm417, %v392, 0
      %v440 = vsel %vm417, %v393, 0
      %v443 = vsel %vm417, %v394, 0
      %v446 = vsel %vm417, %v395, 0
      %v449 = vsel %vm417, %v396, 0
      %v452 = vsel %vm417, %v397, 0
      %v455 = vsel %vm417, %v398, 0
      %v458 = vsel %vm417, %v399, 0
      %v461 = vsel %vm417, %v400, 0
      %v464 = vsel %vm417, %v401, 0
      %vm466 = vcmask 1041408
      %v468 = vsel %vm466, %v414, 0
      %470 = vmatprep.subr.bf16.mxu0 0
      %471 = vmatpush1.bf16.msra.mxu0 0
      %472 = vmatprep.subr.bf16.mxu0 0
      %473 = vmatpush1.bf16.msra.mxu0 0
      %474 = vmatprep.subr.bf16.mxu0 0
      %475 = vmatpush1.bf16.msra.mxu0 0
      %476 = vmatprep.subr.bf16.mxu0 0
      %477 = vmatpush1.bf16.msra.mxu0 0
      %478 = vmatprep.subr.bf16.mxu0 0
      %479 = vmatpush1.bf16.msra.mxu0 0
      %480 = vmatprep.subr.bf16.mxu0 0
      %481 = vmatpush1.bf16.msra.mxu0 %v468
      %482 = vmatprep.subr.bf16.mxu0 0
      %483 = vmatpush1.bf16.msra.mxu0 %v413
      %484 = vmatprep.subr.bf16.mxu0 0
      %485 = vmatpush1.bf16.msra.mxu0 %v412
      %486 = vmatprep.subr.bf16.mxu0 0
      %487 = vmatpush2.bf16.msra.mxu0 0
      %488 = vmatprep.subr.bf16.mxu0 0
      %489 = vmatpush2.bf16.msra.mxu0 0
      %490 = vmatprep.subr.bf16.mxu0 0
      %491 = vmatpush2.bf16.msra.mxu0 0
      %492 = vmatprep.subr.bf16.mxu0 0
      %493 = vmatpush2.bf16.msra.mxu0 0
      %494 = vmatprep.subr.bf16.mxu0 0
      %495 = vmatpush2.bf16.msra.mxu0 0
      %496 = vmatprep.subr.bf16.mxu0 0
      %497 = vmatpush2.bf16.msra.mxu0 0
      %498 = vmatprep.subr.bf16.mxu0 0
      %499 = vmatpush2.bf16.msra.mxu0 0
      %500 = vmatprep.subr.bf16.mxu0 0
      %501 = vmatpush2.bf16.msra.mxu0 0
      %502 = vmatprep.mubr.bf16.mxu0 0
      %503 = vmatmul.mubr.bf16.gmra.mxu0 %v419
      %v504 = vpop.f32.mrf.mxu0
      %v505 = vadd.f32 %v320, %v504
      %v506 = vpop.f32.mrf.mxu0
      %v507 = vpop.f32.mrf.mxu0
      %v508 = vadd.f32 %v320, %v507
      %v509 = vpop.f32.mrf.mxu0
      %510 = vmatprep.mubr.bf16.mxu0 0
      %511 = vmatmul.mubr.bf16.gmra.mxu0 %v422
      %v512 = vpop.f32.mrf.mxu0
      %v513 = vadd.f32 %v320, %v512
      %v514 = vpop.f32.mrf.mxu0
      %v515 = vpop.f32.mrf.mxu0
      %v516 = vadd.f32 %v320, %v515
      %v517 = vpop.f32.mrf.mxu0
      %518 = vmatprep.mubr.bf16.mxu0 0
      %519 = vmatmul.mubr.bf16.gmra.mxu0 %v425
      %v520 = vpop.f32.mrf.mxu0
      %v521 = vadd.f32 %v320, %v520
      %v522 = vpop.f32.mrf.mxu0
      %v523 = vpop.f32.mrf.mxu0
      %v524 = vadd.f32 %v320, %v523
      %v525 = vpop.f32.mrf.mxu0
      %526 = vmatprep.mubr.bf16.mxu0 0
      %527 = vmatmul.mubr.bf16.gmra.mxu0 %v428
      %v528 = vpop.f32.mrf.mxu0
      %v529 = vadd.f32 %v320, %v528
      %v530 = vpop.f32.mrf.mxu0
      %v531 = vpop.f32.mrf.mxu0
      %v532 = vadd.f32 %v320, %v531
      %v533 = vpop.f32.mrf.mxu0
      %534 = vmatprep.mubr.bf16.mxu0 0
      %535 = vmatmul.mubr.bf16.gmra.mxu0 %v431
      %v536 = vpop.f32.mrf.mxu0
      %v537 = vadd.f32 %v320, %v536
      %v538 = vpop.f32.mrf.mxu0
      %v539 = vpop.f32.mrf.mxu0
      %v540 = vadd.f32 %v320, %v539
      %v541 = vpop.f32.mrf.mxu0
      %542 = vmatprep.mubr.bf16.mxu0 0
      %543 = vmatmul.mubr.bf16.gmra.mxu0 %v434
      %v544 = vpop.f32.mrf.mxu0
      %v545 = vadd.f32 %v320, %v544
      %v546 = vpop.f32.mrf.mxu0
      %v547 = vpop.f32.mrf.mxu0
      %v548 = vadd.f32 %v320, %v547
      %v549 = vpop.f32.mrf.mxu0
      %550 = vmatprep.mubr.bf16.mxu0 0
      %551 = vmatmul.mubr.bf16.gmra.mxu0 %v437
      %v552 = vpop.f32.mrf.mxu0
      %v553 = vadd.f32 %v320, %v552
      %v554 = vpop.f32.mrf.mxu0
      %v555 = vpop.f32.mrf.mxu0
      %v556 = vadd.f32 %v320, %v555
      %v557 = vpop.f32.mrf.mxu0
      %558 = vmatprep.mubr.bf16.mxu0 0
      %559 = vmatmul.mubr.bf16.gmra.mxu0 %v440
      %v560 = vpop.f32.mrf.mxu0
      %v561 = vadd.f32 %v320, %v560
      %v562 = vpop.f32.mrf.mxu0
      %v563 = vpop.f32.mrf.mxu0
      %v564 = vadd.f32 %v320, %v563
      %v565 = vpop.f32.mrf.mxu0
      %566 = vmatprep.mubr.bf16.mxu0 0
      %567 = vmatmul.mubr.bf16.gmra.mxu0 %v443
      %v568 = vpop.f32.mrf.mxu0
      %v569 = vadd.f32 %v320, %v568
      %v570 = vpop.f32.mrf.mxu0
      %v571 = vpop.f32.mrf.mxu0
      %v572 = vadd.f32 %v320, %v571
      %v573 = vpop.f32.mrf.mxu0
      %574 = vmatprep.mubr.bf16.mxu0 0
      %575 = vmatmul.mubr.bf16.gmra.mxu0 %v446
      %v576 = vpop.f32.mrf.mxu0
      %v577 = vadd.f32 %v320, %v576
      %v578 = vpop.f32.mrf.mxu0
      %v579 = vpop.f32.mrf.mxu0
      %v580 = vadd.f32 %v320, %v579
      %v581 = vpop.f32.mrf.mxu0
      %582 = vmatprep.mubr.bf16.mxu0 0
      %583 = vmatmul.mubr.bf16.gmra.mxu0 %v449
      %v584 = vpop.f32.mrf.mxu0
      %v585 = vadd.f32 %v320, %v584
      %v586 = vpop.f32.mrf.mxu0
      %v587 = vpop.f32.mrf.mxu0
      %v588 = vadd.f32 %v320, %v587
      %v589 = vpop.f32.mrf.mxu0
      %590 = vmatprep.mubr.bf16.mxu0 0
      %591 = vmatmul.mubr.bf16.gmra.mxu0 %v452
      %v592 = vpop.f32.mrf.mxu0
      %v593 = vadd.f32 %v320, %v592
      %v594 = vpop.f32.mrf.mxu0
      %v595 = vpop.f32.mrf.mxu0
      %v596 = vadd.f32 %v320, %v595
      %v597 = vpop.f32.mrf.mxu0
      %598 = vmatprep.mubr.bf16.mxu0 0
      %599 = vmatmul.mubr.bf16.gmra.mxu0 %v455
      %v600 = vpop.f32.mrf.mxu0
      %v601 = vadd.f32 %v320, %v600
      %v602 = vpop.f32.mrf.mxu0
      %v603 = vpop.f32.mrf.mxu0
      %v604 = vadd.f32 %v320, %v603
      %v605 = vpop.f32.mrf.mxu0
      %606 = vmatprep.mubr.bf16.mxu0 0
      %607 = vmatmul.mubr.bf16.gmra.mxu0 %v458
      %v608 = vpop.f32.mrf.mxu0
      %v609 = vadd.f32 %v320, %v608
      %v610 = vpop.f32.mrf.mxu0
      %v611 = vpop.f32.mrf.mxu0
      %v612 = vadd.f32 %v320, %v611
      %v613 = vpop.f32.mrf.mxu0
      %614 = vmatprep.mubr.bf16.mxu0 0
      %615 = vmatmul.mubr.bf16.gmra.mxu0 %v461
      %v616 = vpop.f32.mrf.mxu0
      %v617 = vadd.f32 %v320, %v616
      %v618 = vpop.f32.mrf.mxu0
      %v619 = vpop.f32.mrf.mxu0
      %v620 = vadd.f32 %v320, %v619
      %v621 = vpop.f32.mrf.mxu0
      %622 = vmatprep.mubr.bf16.mxu0 0
      %623 = vmatmul.mubr.bf16.gmra.mxu0 %v464
      %v624 = vpop.f32.mrf.mxu0
      %v625 = vadd.f32 %v320, %v624
      %v626 = vpop.f32.mrf.mxu0
      %v627 = vpop.f32.mrf.mxu0
      %v628 = vadd.f32 %v320, %v627
      %v629 = vpop.f32.mrf.mxu0
      %630 = vdwg.mxu0
      %v631 = vmax.f32 %v505, 0.0
      %v632 = vmax.f32 %v508, 0.0
      %v633 = vmax.f32 %v513, 0.0
      %v634 = vmax.f32 %v516, 0.0
      %v635 = vmax.f32 %v521, 0.0
      %v636 = vmax.f32 %v524, 0.0
      %v637 = vmax.f32 %v529, 0.0
      %v638 = vmax.f32 %v532, 0.0
      %v639 = vmax.f32 %v537, 0.0
      %v640 = vmax.f32 %v540, 0.0
      %v641 = vmax.f32 %v545, 0.0
      %v642 = vmax.f32 %v548, 0.0
      %v643 = vmax.f32 %v553, 0.0
      %v644 = vmax.f32 %v556, 0.0
      %v645 = vmax.f32 %v561, 0.0
      %v646 = vmax.f32 %v564, 0.0
      %v647 = vmax.f32 %v569, 0.0
      %v648 = vmax.f32 %v572, 0.0
      %v649 = vmax.f32 %v577, 0.0
      %v650 = vmax.f32 %v580, 0.0
      %v651 = vmax.f32 %v585, 0.0
      %v652 = vmax.f32 %v588, 0.0
      %v653 = vmax.f32 %v593, 0.0
      %v654 = vmax.f32 %v596, 0.0
      %v655 = vmax.f32 %v601, 0.0
      %v656 = vmax.f32 %v604, 0.0
      %v657 = vmax.f32 %v609, 0.0
      %v658 = vmax.f32 %v612, 0.0
      %v659 = vmax.f32 %v617, 0.0
      %v660 = vmax.f32 %v620, 0.0
      %v661 = vmax.f32 %v625, 0.0
      %v662 = vmax.f32 %v628, 0.0
      %v663 = vpack.c.bf16 %v632, %v631
      %v664 = vpack.c.bf16 %v634, %v633
      %v665 = vpack.c.bf16 %v636, %v635
      %v666 = vpack.c.bf16 %v638, %v637
      %v667 = vpack.c.bf16 %v640, %v639
      %v668 = vpack.c.bf16 %v642, %v641
      %v669 = vpack.c.bf16 %v644, %v643
      %v670 = vpack.c.bf16 %v646, %v645
      %v671 = vpack.c.bf16 %v648, %v647
      %v672 = vpack.c.bf16 %v650, %v649
      %v673 = vpack.c.bf16 %v652, %v651
      %v674 = vpack.c.bf16 %v654, %v653
      %v675 = vpack.c.bf16 %v656, %v655
      %v676 = vpack.c.bf16 %v658, %v657
      %v677 = vpack.c.bf16 %v660, %v659
      %v678 = vpack.c.bf16 %v662, %v661
      %v679 = vld [vmem:[%s3] sm:$0x3]
      %v680 = vld [vmem:[%s4] sm:$0x1]
      %v682 = vlaneseq
      %v683 = vshrl.u32 %v682, 7
      %v684 = vsub.s32 0, %v683
      %v685 = vrot.slane %v680, %v684
      %vm687 = vcmask 31744
      %v689 = vsel %vm687, %v663, 0
      %v692 = vsel %vm687, %v664, 0
      %v695 = vsel %vm687, %v665, 0
      %v698 = vsel %vm687, %v666, 0
      %v701 = vsel %vm687, %v667, 0
      %v704 = vsel %vm687, %v668, 0
      %v707 = vsel %vm687, %v669, 0
      %v710 = vsel %vm687, %v670, 0
      %v713 = vsel %vm687, %v671, 0
      %v716 = vsel %vm687, %v672, 0
      %v719 = vsel %vm687, %v673, 0
      %v722 = vsel %vm687, %v674, 0
      %v725 = vsel %vm687, %v675, 0
      %v728 = vsel %vm687, %v676, 0
      %v731 = vsel %vm687, %v677, 0
      %v734 = vsel %vm687, %v678, 0
      %v737 = vsel %vm466, %v679, 0
      %739 = vmatprep.subr.bf16.mxu0 0
      %740 = vmatpush1.bf16.msra.mxu0 0
      %741 = vmatprep.subr.bf16.mxu0 0
      %742 = vmatpush1.bf16.msra.mxu0 0
      %743 = vmatprep.subr.bf16.mxu0 0
      %744 = vmatpush1.bf16.msra.mxu0 0
      %745 = vmatprep.subr.bf16.mxu0 0
      %746 = vmatpush1.bf16.msra.mxu0 0
      %747 = vmatprep.subr.bf16.mxu0 0
      %748 = vmatpush1.bf16.msra.mxu0 0
      %749 = vmatprep.subr.bf16.mxu0 0
      %750 = vmatpush1.bf16.msra.mxu0 0
      %751 = vmatprep.subr.bf16.mxu0 0
      %752 = vmatpush1.bf16.msra.mxu0 0
      %753 = vmatprep.subr.bf16.mxu0 0
      %754 = vmatpush1.bf16.msra.mxu0 %v737
      %755 = vmatprep.subr.bf16.mxu0 0
      %756 = vmatpush2.bf16.msra.mxu0 0
      %757 = vmatprep.subr.bf16.mxu0 0
      %758 = vmatpush2.bf16.msra.mxu0 0
      %759 = vmatprep.subr.bf16.mxu0 0
      %760 = vmatpush2.bf16.msra.mxu0 0
      %761 = vmatprep.subr.bf16.mxu0 0
      %762 = vmatpush2.bf16.msra.mxu0 0
      %763 = vmatprep.subr.bf16.mxu0 0
      %764 = vmatpush2.bf16.msra.mxu0 0
      %765 = vmatprep.subr.bf16.mxu0 0
      %766 = vmatpush2.bf16.msra.mxu0 0
      %767 = vmatprep.subr.bf16.mxu0 0
      %768 = vmatpush2.bf16.msra.mxu0 0
      %769 = vmatprep.subr.bf16.mxu0 0
      %770 = vmatpush2.bf16.msra.mxu0 0
      %771 = vmatprep.mubr.bf16.mxu0 0
      %772 = vmatmul.mubr.bf16.gmra.mxu0 %v689
      %v773 = vpop.f32.mrf.mxu0
      %v774 = vadd.f32 %v685, %v773
      %v775 = vpop.f32.mrf.mxu0
      %v776 = vpop.f32.mrf.mxu0
      %v777 = vadd.f32 %v685, %v776
      %v778 = vpop.f32.mrf.mxu0
      %779 = vmatprep.mubr.bf16.mxu0 0
      %780 = vmatmul.mubr.bf16.gmra.mxu0 %v692
      %v781 = vpop.f32.mrf.mxu0
      %v782 = vadd.f32 %v685, %v781
      %v783 = vpop.f32.mrf.mxu0
      %v784 = vpop.f32.mrf.mxu0
      %v785 = vadd.f32 %v685, %v784
      %v786 = vpop.f32.mrf.mxu0
      %787 = vmatprep.mubr.bf16.mxu0 0
      %788 = vmatmul.mubr.bf16.gmra.mxu0 %v695
      %v789 = vpop.f32.mrf.mxu0
      %v790 = vadd.f32 %v685, %v789
      %v791 = vpop.f32.mrf.mxu0
      %v792 = vpop.f32.mrf.mxu0
      %v793 = vadd.f32 %v685, %v792
      %v794 = vpop.f32.mrf.mxu0
      %795 = vmatprep.mubr.bf16.mxu0 0
      %796 = vmatmul.mubr.bf16.gmra.mxu0 %v698
      %v797 = vpop.f32.mrf.mxu0
      %v798 = vadd.f32 %v685, %v797
      %v799 = vpop.f32.mrf.mxu0
      %v800 = vpop.f32.mrf.mxu0
      %v801 = vadd.f32 %v685, %v800
      %v802 = vpop.f32.mrf.mxu0
      %803 = vmatprep.mubr.bf16.mxu0 0
      %804 = vmatmul.mubr.bf16.gmra.mxu0 %v701
      %v805 = vpop.f32.mrf.mxu0
      %v806 = vadd.f32 %v685, %v805
      %v807 = vpop.f32.mrf.mxu0
      %v808 = vpop.f32.mrf.mxu0
      %v809 = vadd.f32 %v685, %v808
      %v810 = vpop.f32.mrf.mxu0
      %811 = vmatprep.mubr.bf16.mxu0 0
      %812 = vmatmul.mubr.bf16.gmra.mxu0 %v704
      %v813 = vpop.f32.mrf.mxu0
      %v814 = vadd.f32 %v685, %v813
      %v815 = vpop.f32.mrf.mxu0
      %v816 = vpop.f32.mrf.mxu0
      %v817 = vadd.f32 %v685, %v816
      %v818 = vpop.f32.mrf.mxu0
      %819 = vmatprep.mubr.bf16.mxu0 0
      %820 = vmatmul.mubr.bf16.gmra.mxu0 %v707
      %v821 = vpop.f32.mrf.mxu0
      %v822 = vadd.f32 %v685, %v821
      %v823 = vpop.f32.mrf.mxu0
      %v824 = vpop.f32.mrf.mxu0
      %v825 = vadd.f32 %v685, %v824
      %v826 = vpop.f32.mrf.mxu0
      %827 = vmatprep.mubr.bf16.mxu0 0
      %828 = vmatmul.mubr.bf16.gmra.mxu0 %v710
      %v829 = vpop.f32.mrf.mxu0
      %v830 = vadd.f32 %v685, %v829
      %v831 = vpop.f32.mrf.mxu0
      %v832 = vpop.f32.mrf.mxu0
      %v833 = vadd.f32 %v685, %v832
      %v834 = vpop.f32.mrf.mxu0
      %835 = vmatprep.mubr.bf16.mxu0 0
      %836 = vmatmul.mubr.bf16.gmra.mxu0 %v713
      %v837 = vpop.f32.mrf.mxu0
      %v838 = vadd.f32 %v685, %v837
      %v839 = vpop.f32.mrf.mxu0
      %v840 = vpop.f32.mrf.mxu0
      %v841 = vadd.f32 %v685, %v840
      %v842 = vpop.f32.mrf.mxu0
      %843 = vmatprep.mubr.bf16.mxu0 0
      %844 = vmatmul.mubr.bf16.gmra.mxu0 %v716
      %v845 = vpop.f32.mrf.mxu0
      %v846 = vadd.f32 %v685, %v845
      %v847 = vpop.f32.mrf.mxu0
      %v848 = vpop.f32.mrf.mxu0
      %v849 = vadd.f32 %v685, %v848
      %v850 = vpop.f32.mrf.mxu0
      %851 = vmatprep.mubr.bf16.mxu0 0
      %852 = vmatmul.mubr.bf16.gmra.mxu0 %v719
      %v853 = vpop.f32.mrf.mxu0
      %v854 = vadd.f32 %v685, %v853
      %v855 = vpop.f32.mrf.mxu0
      %v856 = vpop.f32.mrf.mxu0
      %v857 = vadd.f32 %v685, %v856
      %v858 = vpop.f32.mrf.mxu0
      %859 = vmatprep.mubr.bf16.mxu0 0
      %860 = vmatmul.mubr.bf16.gmra.mxu0 %v722
      %v861 = vpop.f32.mrf.mxu0
      %v862 = vadd.f32 %v685, %v861
      %v863 = vpop.f32.mrf.mxu0
      %v864 = vpop.f32.mrf.mxu0
      %v865 = vadd.f32 %v685, %v864
      %v866 = vpop.f32.mrf.mxu0
      %867 = vmatprep.mubr.bf16.mxu0 0
      %868 = vmatmul.mubr.bf16.gmra.mxu0 %v725
      %v869 = vpop.f32.mrf.mxu0
      %v870 = vadd.f32 %v685, %v869
      %v871 = vpop.f32.mrf.mxu0
      %v872 = vpop.f32.mrf.mxu0
      %v873 = vadd.f32 %v685, %v872
      %v874 = vpop.f32.mrf.mxu0
      %875 = vmatprep.mubr.bf16.mxu0 0
      %876 = vmatmul.mubr.bf16.gmra.mxu0 %v728
      %v877 = vpop.f32.mrf.mxu0
      %v878 = vadd.f32 %v685, %v877
      %v879 = vpop.f32.mrf.mxu0
      %v880 = vpop.f32.mrf.mxu0
      %v881 = vadd.f32 %v685, %v880
      %v882 = vpop.f32.mrf.mxu0
      %883 = vmatprep.mubr.bf16.mxu0 0
      %884 = vmatmul.mubr.bf16.gmra.mxu0 %v731
      %v885 = vpop.f32.mrf.mxu0
      %v886 = vadd.f32 %v685, %v885
      %v887 = vpop.f32.mrf.mxu0
      %v888 = vpop.f32.mrf.mxu0
      %v889 = vadd.f32 %v685, %v888
      %v890 = vpop.f32.mrf.mxu0
      %891 = vmatprep.mubr.bf16.mxu0 0
      %892 = vmatmul.mubr.bf16.gmra.mxu0 %v734
      %v893 = vpop.f32.mrf.mxu0
      %v894 = vadd.f32 %v685, %v893
      %v895 = vpop.f32.mrf.mxu0
      %v896 = vpop.f32.mrf.mxu0
      %v897 = vadd.f32 %v685, %v896
      %v898 = vpop.f32.mrf.mxu0
      %899 = vdwg.mxu0
      %v900 = vld [vmem:[%s269] sm:$0xf]
      %v901 = vld [vmem:[%s269 + $0x4] sm:$0xf]
      %v902 = vld [vmem:[%s269 + $0x8] sm:$0xf]
      %v903 = vld [vmem:[%s269 + $0xc] sm:$0xf]
      %v904 = vld [vmem:[%s269 + $0x10] sm:$0xf]
      %v905 = vld [vmem:[%s269 + $0x14] sm:$0xf]
      %v906 = vld [vmem:[%s269 + $0x18] sm:$0xf]
      %v907 = vld [vmem:[%s269 + $0x1c] sm:$0xf]
      %v908 = vld [vmem:[%s269 + $0x20] sm:$0xf]
      %v909 = vld [vmem:[%s269 + $0x24] sm:$0xf]
      %v910 = vld [vmem:[%s269 + $0x28] sm:$0xf]
      %v911 = vld [vmem:[%s269 + $0x2c] sm:$0xf]
      %v912 = vld [vmem:[%s269 + $0x30] sm:$0xf]
      %v913 = vld [vmem:[%s269 + $0x34] sm:$0xf]
      %v914 = vld [vmem:[%s269 + $0x38] sm:$0xf]
      %v915 = vld [vmem:[%s269 + $0x3c] sm:$0xf]
      %v916 = vld [vmem:[%s269 + $0x40] sm:$0xf]
      %v917 = vld [vmem:[%s269 + $0x44] sm:$0xf]
      %v918 = vld [vmem:[%s269 + $0x48] sm:$0xf]
      %v919 = vld [vmem:[%s269 + $0x4c] sm:$0xf]
      %v920 = vld [vmem:[%s269 + $0x50] sm:$0xf]
      %v921 = vld [vmem:[%s269 + $0x54] sm:$0xf]
      %v922 = vld [vmem:[%s269 + $0x58] sm:$0xf]
      %v923 = vld [vmem:[%s269 + $0x5c] sm:$0xf]
      %v924 = vld [vmem:[%s269 + $0x60] sm:$0xf]
      %v925 = vld [vmem:[%s269 + $0x64] sm:$0xf]
      %v926 = vld [vmem:[%s269 + $0x68] sm:$0xf]
      %v927 = vld [vmem:[%s269 + $0x6c] sm:$0xf]
      %v928 = vld [vmem:[%s269 + $0x70] sm:$0xf]
      %v929 = vld [vmem:[%s269 + $0x74] sm:$0xf]
      %v930 = vld [vmem:[%s269 + $0x78] sm:$0xf]
      %v931 = vld [vmem:[%s269 + $0x7c] sm:$0xf]
      %v932 = vunpack.c.l.bf16 %v900
      %v933 = vunpack.c.l.bf16 %v901
      %v934 = vunpack.c.l.bf16 %v902
      %v935 = vunpack.c.l.bf16 %v903
      %v936 = vunpack.c.l.bf16 %v904
      %v937 = vunpack.c.l.bf16 %v905
      %v938 = vunpack.c.l.bf16 %v906
      %v939 = vunpack.c.l.bf16 %v907
      %v940 = vunpack.c.l.bf16 %v908
      %v941 = vunpack.c.l.bf16 %v909
      %v942 = vunpack.c.l.bf16 %v910
      %v943 = vunpack.c.l.bf16 %v911
      %v944 = vunpack.c.l.bf16 %v912
      %v945 = vunpack.c.l.bf16 %v913
      %v946 = vunpack.c.l.bf16 %v914
      %v947 = vunpack.c.l.bf16 %v915
      %v948 = vunpack.c.l.bf16 %v916
      %v949 = vunpack.c.l.bf16 %v917
      %v950 = vunpack.c.l.bf16 %v918
      %v951 = vunpack.c.l.bf16 %v919
      %v952 = vunpack.c.l.bf16 %v920
      %v953 = vunpack.c.l.bf16 %v921
      %v954 = vunpack.c.l.bf16 %v922
      %v955 = vunpack.c.l.bf16 %v923
      %v956 = vunpack.c.l.bf16 %v924
      %v957 = vunpack.c.l.bf16 %v925
      %v958 = vunpack.c.l.bf16 %v926
      %v959 = vunpack.c.l.bf16 %v927
      %v960 = vunpack.c.l.bf16 %v928
      %v961 = vunpack.c.l.bf16 %v929
      %v962 = vunpack.c.l.bf16 %v930
      %v963 = vunpack.c.l.bf16 %v931
      %v964 = vadd.f32 %v774, %v932
      %v965 = vadd.f32 %v777, %v933
      %v966 = vadd.f32 %v782, %v934
      %v967 = vadd.f32 %v785, %v935
      %v968 = vadd.f32 %v790, %v936
      %v969 = vadd.f32 %v793, %v937
      %v970 = vadd.f32 %v798, %v938
      %v971 = vadd.f32 %v801, %v939
      %v972 = vadd.f32 %v806, %v940
      %v973 = vadd.f32 %v809, %v941
      %v974 = vadd.f32 %v814, %v942
      %v975 = vadd.f32 %v817, %v943
      %v976 = vadd.f32 %v822, %v944
      %v977 = vadd.f32 %v825, %v945
      %v978 = vadd.f32 %v830, %v946
      %v979 = vadd.f32 %v833, %v947
      %v980 = vadd.f32 %v838, %v948
      %v981 = vadd.f32 %v841, %v949
      %v982 = vadd.f32 %v846, %v950
      %v983 = vadd.f32 %v849, %v951
      %v984 = vadd.f32 %v854, %v952
      %v985 = vadd.f32 %v857, %v953
      %v986 = vadd.f32 %v862, %v954
      %v987 = vadd.f32 %v865, %v955
      %v988 = vadd.f32 %v870, %v956
      %v989 = vadd.f32 %v873, %v957
      %v990 = vadd.f32 %v878, %v958
      %v991 = vadd.f32 %v881, %v959
      %v992 = vadd.f32 %v886, %v960
      %v993 = vadd.f32 %v889, %v961
      %v994 = vadd.f32 %v894, %v962
      %v995 = vadd.f32 %v897, %v963
      %v996 = vmax.f32 %v964, 0.0
      %v997 = vmax.f32 %v965, 0.0
      %v998 = vmax.f32 %v966, 0.0
      %v999 = vmax.f32 %v967, 0.0
      %v1000 = vmax.f32 %v968, 0.0
      %v1001 = vmax.f32 %v969, 0.0
      %v1002 = vmax.f32 %v970, 0.0
      %v1003 = vmax.f32 %v971, 0.0
      %v1004 = vmax.f32 %v972, 0.0
      %v1005 = vmax.f32 %v973, 0.0
      %v1006 = vmax.f32 %v974, 0.0
      %v1007 = vmax.f32 %v975, 0.0
      %v1008 = vmax.f32 %v976, 0.0
      %v1009 = vmax.f32 %v977, 0.0
      %v1010 = vmax.f32 %v978, 0.0
      %v1011 = vmax.f32 %v979, 0.0
      %v1012 = vmax.f32 %v980, 0.0
      %v1013 = vmax.f32 %v981, 0.0
      %v1014 = vmax.f32 %v982, 0.0
      %v1015 = vmax.f32 %v983, 0.0
      %v1016 = vmax.f32 %v984, 0.0
      %v1017 = vmax.f32 %v985, 0.0
      %v1018 = vmax.f32 %v986, 0.0
      %v1019 = vmax.f32 %v987, 0.0
      %v1020 = vmax.f32 %v988, 0.0
      %v1021 = vmax.f32 %v989, 0.0
      %v1022 = vmax.f32 %v990, 0.0
      %v1023 = vmax.f32 %v991, 0.0
      %v1024 = vmax.f32 %v992, 0.0
      %v1025 = vmax.f32 %v993, 0.0
      %v1026 = vmax.f32 %v994, 0.0
      %v1027 = vmax.f32 %v995, 0.0
      %vm1028 = vcmask 130048
      %1029 = vst.msk [vmem:[%s275] sm:$0xff] %vm1028, %v996
      %1030 = vst.msk [vmem:[%s275 + $0x8] sm:$0xff] %vm1028, %v997
      %1031 = vst.msk [vmem:[%s275 + $0x10] sm:$0xff] %vm1028, %v998
      %1032 = vst.msk [vmem:[%s275 + $0x18] sm:$0xff] %vm1028, %v999
      %1033 = vst.msk [vmem:[%s275 + $0x20] sm:$0xff] %vm1028, %v1000
      %1034 = vst.msk [vmem:[%s275 + $0x28] sm:$0xff] %vm1028, %v1001
      %1035 = vst.msk [vmem:[%s275 + $0x30] sm:$0xff] %vm1028, %v1002
      %1036 = vst.msk [vmem:[%s275 + $0x38] sm:$0xff] %vm1028, %v1003
      %1037 = vst.msk [vmem:[%s275 + $0x40] sm:$0xff] %vm1028, %v1004
      %1038 = vst.msk [vmem:[%s275 + $0x48] sm:$0xff] %vm1028, %v1005
      %1039 = vst.msk [vmem:[%s275 + $0x50] sm:$0xff] %vm1028, %v1006
      %1040 = vst.msk [vmem:[%s275 + $0x58] sm:$0xff] %vm1028, %v1007
      %1041 = vst.msk [vmem:[%s275 + $0x60] sm:$0xff] %vm1028, %v1008
      %1042 = vst.msk [vmem:[%s275 + $0x68] sm:$0xff] %vm1028, %v1009
      %1043 = vst.msk [vmem:[%s275 + $0x70] sm:$0xff] %vm1028, %v1010
      %1044 = vst.msk [vmem:[%s275 + $0x78] sm:$0xff] %vm1028, %v1011
      %1045 = vst.msk [vmem:[%s275 + $0x80] sm:$0xff] %vm1028, %v1012
      %1046 = vst.msk [vmem:[%s275 + $0x88] sm:$0xff] %vm1028, %v1013
      %1047 = vst.msk [vmem:[%s275 + $0x90] sm:$0xff] %vm1028, %v1014
      %1048 = vst.msk [vmem:[%s275 + $0x98] sm:$0xff] %vm1028, %v1015
      %1049 = vst.msk [vmem:[%s275 + $0xa0] sm:$0xff] %vm1028, %v1016
      %1050 = vst.msk [vmem:[%s275 + $0xa8] sm:$0xff] %vm1028, %v1017
      %1051 = vst.msk [vmem:[%s275 + $0xb0] sm:$0xff] %vm1028, %v1018
      %1052 = vst.msk [vmem:[%s275 + $0xb8] sm:$0xff] %vm1028, %v1019
      %1053 = vst.msk [vmem:[%s275 + $0xc0] sm:$0xff] %vm1028, %v1020
      %1054 = vst.msk [vmem:[%s275 + $0xc8] sm:$0xff] %vm1028, %v1021
      %1055 = vst.msk [vmem:[%s275 + $0xd0] sm:$0xff] %vm1028, %v1022
      %1056 = vst.msk [vmem:[%s275 + $0xd8] sm:$0xff] %vm1028, %v1023
      %1057 = vst.msk [vmem:[%s275 + $0xe0] sm:$0xff] %vm1028, %v1024
      %1058 = vst.msk [vmem:[%s275 + $0xe8] sm:$0xff] %vm1028, %v1025
      %1059 = vst.msk [vmem:[%s275 + $0xf0] sm:$0xff] %vm1028, %v1026
      %1060 = vst.msk [vmem:[%s275 + $0xf8] sm:$0xff] %vm1028, %v1027
      %s1061 = smul.u32 32, %s17
      %p1062 = scmp.lt.s32.totalorder %s1061, 63
      %s1063 = scalar_select %p1062, %s1061, 63
      %s1064 = smul.addr %s1063, 8
      %s1065 = scalar_lea.vmem %s6, %s1064
      // Predicated region
      $region45: #{_lambda_.3} parent=43 // pred_check
        %p1066 = pneg %p171
      $region46: #{_lambda_.3} parent=43 // pred_check_branch
        %1068 = sbr.rel (%p1066) target = $region48
      $region47: #{_lambda_.3} parent=43 // pred_region
        %s1069 = smul.u32 32, %s17
      $region48: #{_lambda_.3} parent=43 // pred_fallthru
        _
    $region44: #{_lambda_.3} parent=5 // pred_fallthru
      _
    %p1070 = scmp.le.s32.totalorder 2, %s12
    // Predicated region
    $region49: #{_lambda_.3} parent=5 // pred_check
      %p1071 = pneg %p1070
    $region50: #{_lambda_.3} parent=5 // pred_check_branch
      %1073 = sbr.rel (%p1071) target = $region52
    $region51: #{_lambda_.3} parent=5 // pred_region
      %s1074 = ssub.s32 %s12, 2
      // Predicated region
      $region53: #{_lambda_.3} parent=51 // pred_check
        %p1075 = pneg %p177
      $region54: #{_lambda_.3} parent=51 // pred_check_branch
        %1077 = sbr.rel (%p1075) target = $region56
      $region55: #{_lambda_.3} parent=51 // pred_region
        %s1078 = smul.u32 32, %s18
        %p1079 = scmp.lt.s32.totalorder %s1078, 63
        %s1080 = scalar_select %p1079, %s1078, 63
        %s1081 = smul.addr %s1080, 8
        %s1082 = scalar_lea.vmem %s6, %s1081
      $region56: #{_lambda_.3} parent=51 // pred_fallthru
        _
    $region52: #{_lambda_.3} parent=5 // pred_fallthru
      _
  $region6: #{_lambda_.3} parent=0 // loop_footer
    %s16 = sadd.s32 1, %s12
  $region7: #{_lambda_.3} parent=0 // loop_footer_branch
    %11 = sbr.rel target = $region3
  $region8: #{_lambda_.3} parent=0 // loop_exit
    _

</llo_original>
